<compile_context>
chip_gen: v5e
topology: v5e:2x2
jax: 0.10.0
libtpu: 0.0.40
codegen_flags: <defaults>
</compile_context>

<pallas_src>
import numpy as np
import jax
import jax.numpy as jnp
from jax.experimental import pallas as pl
from jax.experimental.pallas import tpu as pltpu

_SQRT2_INV = 1.0 / np.sqrt(2.0)
_LANE = 128
_MAX_SPATIAL_TILE = 2048      # upper cap on the lane-dim (H*W) tile
_HIDDEN_CHUNK = 512           # in-kernel slab size along the hidden channel dim


def _gelu_exact(x):
    # PyTorch nn.GELU() default: exact erf-based GELU (kept exact, not tanh-approx).
    return 0.5 * x * (1.0 + jax.lax.erf(x * _SQRT2_INV))


def _make_kernel(chid, hidden_chunk):
    n_slabs = pl.cdiv(chid, hidden_chunk)

    def mlp_kernel(x_ref, w1_ref, b1_ref, w2_ref, b2_ref, o_ref):
        # x_ref : (1, Cin, T)   activations (bf16 preferred)
        # w1_ref: (Chid, Cin)   bf16        b1_ref: (Chid, 1) f32
        # w2_ref: (Cout, Chid)  bf16        b2_ref: (Cout, 1) f32
        # o_ref : (1, Cout, T)  same dtype as input
        xb = x_ref[0].astype(jnp.bfloat16)          # no-op when x is already bf16

        acc = None
        # Chunk the hidden dim so the live (slab, T) f32/bf16 intermediates stay
        # bounded independent of Chid (keeps T large within v7x's 64 MiB VMEM).
        for s in range(n_slabs):
            h0 = s * hidden_chunk
            h1 = min(chid, h0 + hidden_chunk)
            # fc1 slab: 1x1 conv == channel matmul, f32 accumulation on the MXU.
            h = jnp.dot(w1_ref[h0:h1, :], xb,
                        preferred_element_type=jnp.float32) + b1_ref[h0:h1, :]
            # exact GELU in f32 (VPU/EUP), then bf16 for the fc2 MXU operand.
            y = _gelu_exact(h).astype(jnp.bfloat16)
            # fc2 partial product, accumulated in f32.
            p = jnp.dot(w2_ref[:, h0:h1], y, preferred_element_type=jnp.float32)
            acc = p if acc is None else acc + p

        o_ref[0] = (acc + b2_ref[...]).astype(o_ref.dtype)
        # TODO(synk): nn.Dropout with drop=0.0 is an identity; nonzero (train-mode)
        #             dropout RNG masking is not modeled.

    return mlp_kernel


def _vmem_capacity_bytes():
    """Physical per-core VMEM; falls back to the smallest current part (v7x, 64 MiB)."""
    try:
        cap = getattr(pltpu.get_tpu_info(), "vmem_capacity_bytes", None)
        if cap:
            return int(cap)
    except Exception:
        pass
    return 64 * 1024 * 1024


def _choose_spatial_tile(hw, cin, chid, cout, act_bytes, budget_bytes,
                         hidden_chunk=_HIDDEN_CHUNK, max_tile=_MAX_SPATIAL_TILE):
    """Largest multiple-of-128 tile T whose per-step working set fits the budget."""
    slab = min(chid, hidden_chunk)
    per_col = (2 * cin * act_bytes          # x block, double-buffered
               + 2 * cout * act_bytes       # out block, double-buffered
               + slab * (4 + 4 + 2)         # f32 fc1 out + f32 GELU + bf16 recast
               + cout * 4)                  # f32 fc2 accumulator
    weight_bytes = (chid * cin + cout * chid) * 2 + (chid + cout) * 4
    avail = max(budget_bytes - weight_bytes, _LANE * per_col)
    t = (avail // per_col) // _LANE * _LANE
    hw_ceil = pl.cdiv(hw, _LANE) * _LANE
    return int(max(_LANE, min(t, max_tile, hw_ceil)))


def mlp_casvit(x_nchw, params):
    """x_nchw: (N, Cin, H, W), bf16 preferred (f32 accepted). Returns (N, Cout, H, W)."""
    w1, b1, w2, b2 = (params[k] for k in ("fc1_w", "fc1_b", "fc2_w", "fc2_b"))
    N, Cin, H, W = x_nchw.shape
    Chid, Cout = w1.shape[0], w2.shape[0]
    HW = H * W

    # Free reshape: per image a 1x1 conv in NCHW is just W @ X with H*W on the lane axis.
    x = x_nchw.reshape(N, Cin, HW)

    # Generation-aware VMEM sizing: ~75% of physical capacity as the scoped limit
    # (96 MiB on 128-MiB parts, 48 MiB on v7x), half of that for the per-step tiles.
    vmem_cap = _vmem_capacity_bytes()
    vmem_limit = min(int(0.75 * vmem_cap), 100 * 1024 * 1024)
    act_bytes = jnp.dtype(x.dtype).itemsize
    T = _choose_spatial_tile(HW, Cin, Chid, Cout, act_bytes, vmem_limit // 2)
    grid = (N, pl.cdiv(HW, T))

    # bf16 weights for the MXU (in a real model these live in HBM as bf16 already).
    w1b = w1.astype(jnp.bfloat16)
    w2b = w2.astype(jnp.bfloat16)

    kernel = _make_kernel(Chid, _HIDDEN_CHUNK)

    cost = pl.CostEstimate(
        flops=2 * N * HW * (Cin * Chid + Chid * Cout),
        transcendentals=N * HW * Chid,                        # erf per hidden element
        bytes_accessed=(N * Cin * HW + N * Cout * HW) * act_bytes
                       + (w1b.size + w2b.size) * 2 + (b1.size + b2.size) * 4,
    )

    def run(single_buffer_weights):
        def const_spec(shape):
            if single_buffer_weights:
                # Weights/biases never change across the grid: no double-buffering.
                return pl.BlockSpec(shape, lambda n, t: (0, 0),
                                    pipeline_mode=pl.Buffered(1))
            return pl.BlockSpec(shape, lambda n, t: (0, 0))

        return pl.pallas_call(
            kernel,
            out_shape=jax.ShapeDtypeStruct((N, Cout, HW), x.dtype),
            grid=grid,
            in_specs=[
                pl.BlockSpec((1, Cin, T), lambda n, t: (n, 0, t)),
                const_spec((Chid, Cin)),
                const_spec((Chid, 1)),
                const_spec((Cout, Chid)),
                const_spec((Cout, 1)),
            ],
            out_specs=pl.BlockSpec((1, Cout, T), lambda n, t: (n, 0, t)),
            compiler_params=pltpu.CompilerParams(
                dimension_semantics=("parallel", "parallel"),
                vmem_limit_bytes=vmem_limit),
            cost_estimate=cost,
        )(x, w1b, b1, w2b, b2)

    try:
        out = run(True)
    except Exception:
        # Fallback for jax versions where pipeline_mode=pl.Buffered(1) on a
        # pallas_call BlockSpec is not supported.
        out = run(False)

    return out.reshape(N, Cout, H, W)


def init_params(key, in_features, hidden_features=None, out_features=None):
    """Deterministic synthetic parameters matching the PyTorch module's shapes.

    PyTorch shapes -> kernel layout:
      fc1.weight (Chid, Cin, 1, 1) -> fc1_w (Chid, Cin)    fc1.bias (Chid,) -> (Chid, 1)
      fc2.weight (Cout, Chid, 1, 1)-> fc2_w (Cout, Chid)   fc2.bias (Cout,) -> (Cout, 1)
    """
    out_features = out_features or in_features
    hidden_features = hidden_features or in_features
    ks = jax.random.split(key, 4)
    s = 0.2
    return dict(
        fc1_w=(s * jax.random.normal(ks[0], (hidden_features, in_features))).astype(jnp.float32),
        fc1_b=(s * jax.random.normal(ks[1], (hidden_features, 1))).astype(jnp.float32),
        fc2_w=(s * jax.random.normal(ks[2], (out_features, hidden_features))).astype(jnp.float32),
        fc2_b=(s * jax.random.normal(ks[3], (out_features, 1))).astype(jnp.float32),
    )


def reference_jax(x_nchw, params):
    """Pure-JAX f32 reference mirroring the PyTorch forward (fc1 -> GELU -> fc2)."""
    w1, b1, w2, b2 = (params[k] for k in ("fc1_w", "fc1_b", "fc2_w", "fc2_b"))
    x = x_nchw.astype(jnp.float32)
    h = jnp.einsum("oc,nchw->nohw", w1, x) + b1[:, 0][None, :, None, None]
    y = _gelu_exact(h)
    out = jnp.einsum("oc,nchw->nohw", w2, y) + b2[:, 0][None, :, None, None]
    return out


if __name__ == "__main__":
    key = jax.random.PRNGKey(0)
    k_x, k_p = jax.random.split(key)

    N, C, H, W = 2, 4, 16, 16
    hidden = 32
    # Activations carried in bf16 end-to-end (the kernel is HBM-bandwidth-bound at
    # CAS-ViT channel counts); the upstream layer is expected to hand over bf16.
    x = jax.random.normal(k_x, (N, C, H, W), dtype=jnp.float32).astype(jnp.bfloat16)

    params = init_params(k_p, in_features=C, hidden_features=hidden)

    out = jax.block_until_ready(mlp_casvit(x, params))
    ref = reference_jax(x, params)

    assert out.shape == (N, C, H, W), out.shape
    # bf16 activations/weights with f32 accumulation -> tolerance loosened vs f32 ref.
    np.testing.assert_allclose(np.asarray(out, dtype=np.float32), np.asarray(ref),
                               rtol=3e-2, atol=3e-2)

    print("KERNEL_OK")
</pallas_src>

<mosaic_0001>
module attributes {stable_mosaic.version = 11 : i64} {
  func.func @mlp_kernel(%arg0: i32, %arg1: i32, %arg2: memref<1x4x256xbf16, #tpu.memory_space<vmem>>, %arg3: memref<32x4xbf16, #tpu.memory_space<vmem>>, %arg4: memref<32x1xf32, #tpu.memory_space<vmem>>, %arg5: memref<4x32xbf16, #tpu.memory_space<vmem>>, %arg6: memref<4x1xf32, #tpu.memory_space<vmem>>, %arg7: memref<1x4x256xbf16, #tpu.memory_space<vmem>>) attributes {dimension_semantics = [#tpu.dimension_semantics<parallel>, #tpu.dimension_semantics<parallel>], iteration_bounds = array<i64: 2, 1>, scalar_prefetch = 0 : i64, scratch_operands = 0 : i64, tpu.core_type = #tpu.core_type<tc>, window_params = [{transform_indices = @transform_0, window_bounds = array<i64: 1, 4, 256>}, {pipeline_mode = #tpu.pipeline_mode<synchronous>, transform_indices = @transform_1, window_bounds = array<i64: 32, 4>}, {pipeline_mode = #tpu.pipeline_mode<synchronous>, transform_indices = @transform_2, window_bounds = array<i64: 32, 1>}, {pipeline_mode = #tpu.pipeline_mode<synchronous>, transform_indices = @transform_3, window_bounds = array<i64: 4, 32>}, {pipeline_mode = #tpu.pipeline_mode<synchronous>, transform_indices = @transform_4, window_bounds = array<i64: 4, 1>}, {transform_indices = @transform_5, window_bounds = array<i64: 1, 4, 256>}]} {
    %c0 = arith.constant 0 : index
    %c0_0 = arith.constant 0 : index
    %c0_1 = arith.constant 0 : index
    %0 = vector.load %arg2[%c0, %c0_0, %c0_1] : memref<1x4x256xbf16, #tpu.memory_space<vmem>>, vector<1x4x256xbf16>
    %1 = vector.shape_cast %0 : vector<1x4x256xbf16> to vector<4x256xbf16>
    %c0_2 = arith.constant 0 : index
    %c0_3 = arith.constant 0 : index
    %2 = vector.load %arg3[%c0_2, %c0_3] : memref<32x4xbf16, #tpu.memory_space<vmem>>, vector<32x4xbf16>
    %cst = arith.constant dense<0.000000e+00> : vector<32x256xf32>
    %3 = tpu.matmul %2, %1, %cst {dimension_numbers = #tpu.dot_dimension_numbers<[1], [0], [0], [1], [0, 0, 1, 1], [], []>} : vector<32x4xbf16>, vector<4x256xbf16>, vector<32x256xf32> -> vector<32x256xf32>
    %c0_4 = arith.constant 0 : index
    %c0_5 = arith.constant 0 : index
    %4 = vector.load %arg4[%c0_4, %c0_5] : memref<32x1xf32, #tpu.memory_space<vmem>>, vector<32x1xf32>
    %5 = vector.broadcast %4 : vector<32x1xf32> to vector<32x256xf32>
    %6 = arith.addf %3, %5 : vector<32x256xf32>
    %cst_6 = arith.constant 5.000000e-01 : f32
    %7 = vector.broadcast %cst_6 : f32 to vector<32x256xf32>
    %8 = arith.mulf %7, %6 : vector<32x256xf32>
    %cst_7 = arith.constant 0.707106769 : f32
    %9 = vector.broadcast %cst_7 : f32 to vector<32x256xf32>
    %10 = arith.mulf %6, %9 : vector<32x256xf32>
    %11 = math.erf %10 : vector<32x256xf32>
    %cst_8 = arith.constant 1.000000e+00 : f32
    %12 = vector.broadcast %cst_8 : f32 to vector<32x256xf32>
    %13 = arith.addf %12, %11 : vector<32x256xf32>
    %14 = arith.mulf %8, %13 : vector<32x256xf32>
    %15 = arith.truncf %14 : vector<32x256xf32> to vector<32x256xbf16>
    %c0_9 = arith.constant 0 : index
    %c0_10 = arith.constant 0 : index
    %16 = vector.load %arg5[%c0_9, %c0_10] : memref<4x32xbf16, #tpu.memory_space<vmem>>, vector<4x32xbf16>
    %cst_11 = arith.constant dense<0.000000e+00> : vector<4x256xf32>
    %17 = tpu.matmul %16, %15, %cst_11 {dimension_numbers = #tpu.dot_dimension_numbers<[1], [0], [0], [1], [0, 0, 1, 1], [], []>} : vector<4x32xbf16>, vector<32x256xbf16>, vector<4x256xf32> -> vector<4x256xf32>
    %c0_12 = arith.constant 0 : index
    %c0_13 = arith.constant 0 : index
    %18 = vector.load %arg6[%c0_12, %c0_13] : memref<4x1xf32, #tpu.memory_space<vmem>>, vector<4x1xf32>
    %19 = vector.broadcast %18 : vector<4x1xf32> to vector<4x256xf32>
    %20 = arith.addf %17, %19 : vector<4x256xf32>
    %21 = arith.truncf %20 : vector<4x256xf32> to vector<4x256xbf16>
    %c0_14 = arith.constant 0 : index
    %c0_15 = arith.constant 0 : index
    %c0_16 = arith.constant 0 : index
    %22 = vector.load %arg7[%c0_14, %c0_15, %c0_16] : memref<1x4x256xbf16, #tpu.memory_space<vmem>>, vector<1x4x256xbf16>
    %23 = vector.shape_cast %22 : vector<1x4x256xbf16> to vector<4x256xbf16>
    %24 = vector.shape_cast %21 : vector<4x256xbf16> to vector<1x4x256xbf16>
    tpu.vector_store %arg7[%c0_14, %c0_15, %c0_16], %24 {strides = array<i32>} : memref<1x4x256xbf16, #tpu.memory_space<vmem>>, vector<1x4x256xbf16>,
    return
  }
  func.func @transform_0(%arg0: i32, %arg1: i32) -> (i32, i32, i32) {
    %c0_i32 = arith.constant 0 : i32
    %c0_i32_0 = arith.constant 0 : i32
    return %arg0, %c0_i32, %arg1 : i32, i32, i32
  }
  func.func @transform_1(%arg0: i32, %arg1: i32) -> (i32, i32) {
    %c0_i32 = arith.constant 0 : i32
    %c0_i32_0 = arith.constant 0 : i32
    %c0_i32_1 = arith.constant 0 : i32
    return %c0_i32, %c0_i32_0 : i32, i32
  }
  func.func @transform_2(%arg0: i32, %arg1: i32) -> (i32, i32) {
    %c0_i32 = arith.constant 0 : i32
    %c0_i32_0 = arith.constant 0 : i32
    %c0_i32_1 = arith.constant 0 : i32
    return %c0_i32, %c0_i32_0 : i32, i32
  }
  func.func @transform_3(%arg0: i32, %arg1: i32) -> (i32, i32) {
    %c0_i32 = arith.constant 0 : i32
    %c0_i32_0 = arith.constant 0 : i32
    %c0_i32_1 = arith.constant 0 : i32
    return %c0_i32, %c0_i32_0 : i32, i32
  }
  func.func @transform_4(%arg0: i32, %arg1: i32) -> (i32, i32) {
    %c0_i32 = arith.constant 0 : i32
    %c0_i32_0 = arith.constant 0 : i32
    %c0_i32_1 = arith.constant 0 : i32
    return %c0_i32, %c0_i32_0 : i32, i32
  }
  func.func @transform_5(%arg0: i32, %arg1: i32) -> (i32, i32, i32) {
    %c0_i32 = arith.constant 0 : i32
    %c0_i32_0 = arith.constant 0 : i32
    return %arg0, %c0_i32, %arg1 : i32, i32, i32
  }
}

module attributes {stable_mosaic.version = 11 : i64} {
  func.func @mlp_kernel(%arg0: i32, %arg1: i32, %arg2: memref<1x4x256xbf16, #tpu.memory_space<vmem>>, %arg3: memref<32x4xbf16, #tpu.memory_space<vmem>>, %arg4: memref<32x1xf32, #tpu.memory_space<vmem>>, %arg5: memref<4x32xbf16, #tpu.memory_space<vmem>>, %arg6: memref<4x1xf32, #tpu.memory_space<vmem>>, %arg7: memref<1x4x256xbf16, #tpu.memory_space<vmem>>) attributes {dimension_semantics = [#tpu.dimension_semantics<parallel>, #tpu.dimension_semantics<parallel>], iteration_bounds = array<i64: 2, 1>, scalar_prefetch = 0 : i64, scratch_operands = 0 : i64, tpu.core_type = #tpu.core_type<tc>, window_params = [{transform_indices = @transform_0, window_bounds = array<i64: 1, 4, 256>}, {pipeline_mode = #tpu.pipeline_mode<synchronous>, transform_indices = @transform_1, window_bounds = array<i64: 32, 4>}, {pipeline_mode = #tpu.pipeline_mode<synchronous>, transform_indices = @transform_2, window_bounds = array<i64: 32, 1>}, {pipeline_mode = #tpu.pipeline_mode<synchronous>, transform_indices = @transform_3, window_bounds = array<i64: 4, 32>}, {pipeline_mode = #tpu.pipeline_mode<synchronous>, transform_indices = @transform_4, window_bounds = array<i64: 4, 1>}, {transform_indices = @transform_5, window_bounds = array<i64: 1, 4, 256>}]} {
    %c0 = arith.constant 0 : index
    %c0_0 = arith.constant 0 : index
    %c0_1 = arith.constant 0 : index
    %0 = vector.load %arg2[%c0, %c0_0, %c0_1] : memref<1x4x256xbf16, #tpu.memory_space<vmem>>, vector<1x4x256xbf16>
    %1 = vector.shape_cast %0 : vector<1x4x256xbf16> to vector<4x256xbf16>
    %c0_2 = arith.constant 0 : index
    %c0_3 = arith.constant 0 : index
    %2 = vector.load %arg3[%c0_2, %c0_3] : memref<32x4xbf16, #tpu.memory_space<vmem>>, vector<32x4xbf16>
    %cst = arith.constant dense<0.000000e+00> : vector<32x256xf32>
    %3 = tpu.matmul %2, %1, %cst {dimension_numbers = #tpu.dot_dimension_numbers<[1], [0], [0], [1], [0, 0, 1, 1], [], []>} : vector<32x4xbf16>, vector<4x256xbf16>, vector<32x256xf32> -> vector<32x256xf32>
    %c0_4 = arith.constant 0 : index
    %c0_5 = arith.constant 0 : index
    %4 = vector.load %arg4[%c0_4, %c0_5] : memref<32x1xf32, #tpu.memory_space<vmem>>, vector<32x1xf32>
    %5 = vector.broadcast %4 : vector<32x1xf32> to vector<32x256xf32>
    %6 = arith.addf %3, %5 : vector<32x256xf32>
    %cst_6 = arith.constant 5.000000e-01 : f32
    %7 = vector.broadcast %cst_6 : f32 to vector<32x256xf32>
    %8 = arith.mulf %7, %6 : vector<32x256xf32>
    %cst_7 = arith.constant 0.707106769 : f32
    %9 = vector.broadcast %cst_7 : f32 to vector<32x256xf32>
    %10 = arith.mulf %6, %9 : vector<32x256xf32>
    %11 = math.erf %10 : vector<32x256xf32>
    %cst_8 = arith.constant 1.000000e+00 : f32
    %12 = vector.broadcast %cst_8 : f32 to vector<32x256xf32>
    %13 = arith.addf %12, %11 : vector<32x256xf32>
    %14 = arith.mulf %8, %13 : vector<32x256xf32>
    %15 = arith.truncf %14 : vector<32x256xf32> to vector<32x256xbf16>
    %c0_9 = arith.constant 0 : index
    %c0_10 = arith.constant 0 : index
    %16 = vector.load %arg5[%c0_9, %c0_10] : memref<4x32xbf16, #tpu.memory_space<vmem>>, vector<4x32xbf16>
    %cst_11 = arith.constant dense<0.000000e+00> : vector<4x256xf32>
    %17 = tpu.matmul %16, %15, %cst_11 {dimension_numbers = #tpu.dot_dimension_numbers<[1], [0], [0], [1], [0, 0, 1, 1], [], []>} : vector<4x32xbf16>, vector<32x256xbf16>, vector<4x256xf32> -> vector<4x256xf32>
    %c0_12 = arith.constant 0 : index
    %c0_13 = arith.constant 0 : index
    %18 = vector.load %arg6[%c0_12, %c0_13] : memref<4x1xf32, #tpu.memory_space<vmem>>, vector<4x1xf32>
    %19 = vector.broadcast %18 : vector<4x1xf32> to vector<4x256xf32>
    %20 = arith.addf %17, %19 : vector<4x256xf32>
    %21 = arith.truncf %20 : vector<4x256xf32> to vector<4x256xbf16>
    %c0_14 = arith.constant 0 : index
    %c0_15 = arith.constant 0 : index
    %c0_16 = arith.constant 0 : index
    %22 = vector.load %arg7[%c0_14, %c0_15, %c0_16] : memref<1x4x256xbf16, #tpu.memory_space<vmem>>, vector<1x4x256xbf16>
    %23 = vector.shape_cast %22 : vector<1x4x256xbf16> to vector<4x256xbf16>
    %24 = vector.shape_cast %21 : vector<4x256xbf16> to vector<1x4x256xbf16>
    tpu.vector_store %arg7[%c0_14, %c0_15, %c0_16], %24 {strides = array<i32>} : memref<1x4x256xbf16, #tpu.memory_space<vmem>>, vector<1x4x256xbf16>,
    return
  }
  func.func @transform_0(%arg0: i32, %arg1: i32) -> (i32, i32, i32) {
    %c0_i32 = arith.constant 0 : i32
    %c0_i32_0 = arith.constant 0 : i32
    return %arg0, %c0_i32, %arg1 : i32, i32, i32
  }
  func.func @transform_1(%arg0: i32, %arg1: i32) -> (i32, i32) {
    %c0_i32 = arith.constant 0 : i32
    %c0_i32_0 = arith.constant 0 : i32
    %c0_i32_1 = arith.constant 0 : i32
    return %c0_i32, %c0_i32_0 : i32, i32
  }
  func.func @transform_2(%arg0: i32, %arg1: i32) -> (i32, i32) {
    %c0_i32 = arith.constant 0 : i32
    %c0_i32_0 = arith.constant 0 : i32
    %c0_i32_1 = arith.constant 0 : i32
    return %c0_i32, %c0_i32_0 : i32, i32
  }
  func.func @transform_3(%arg0: i32, %arg1: i32) -> (i32, i32) {
    %c0_i32 = arith.constant 0 : i32
    %c0_i32_0 = arith.constant 0 : i32
    %c0_i32_1 = arith.constant 0 : i32
    return %c0_i32, %c0_i32_0 : i32, i32
  }
  func.func @transform_4(%arg0: i32, %arg1: i32) -> (i32, i32) {
    %c0_i32 = arith.constant 0 : i32
    %c0_i32_0 = arith.constant 0 : i32
    %c0_i32_1 = arith.constant 0 : i32
    return %c0_i32, %c0_i32_0 : i32, i32
  }
  func.func @transform_5(%arg0: i32, %arg1: i32) -> (i32, i32, i32) {
    %c0_i32 = arith.constant 0 : i32
    %c0_i32_0 = arith.constant 0 : i32
    return %arg0, %c0_i32, %arg1 : i32, i32, i32
  }
}

</mosaic_0001>

<llo_original>
// kernel: tpu_custom_call.1
$region0: #{tpu_custom_call.1}
  #allocation0 [shape = 'u32[]', space=smem, size = 0x4, offset = 0x4, fixed_abs, tag = 'smem constant byte address 0x4 - core index']
  #allocation1 [shape = 'u32[72,128]{1,0:T(1,128)}', space=vmem, size = 0x9000, scoped, tag = 'internal scratch']
  %s0 = inlined_call_operand.vmem [shape: bf16[2,4,256], index: 0, kind: input, shape index: {}]
  %s1 = inlined_call_operand.vmem [shape: bf16[32,4], index: 1, kind: input, shape index: {}]
  %s2 = inlined_call_operand.vmem [shape: f32[32,1], index: 2, kind: input, shape index: {}]
  %s3 = inlined_call_operand.vmem [shape: bf16[4,32], index: 3, kind: input, shape index: {}]
  %s4 = inlined_call_operand.vmem [shape: f32[4,1], index: 4, kind: input, shape index: {}]
  %s5 = inlined_call_operand.hbm [shape: bf16[2,4,256], index: 5, kind: output, shape index: {}]
  %s6 = sld [smem:[#allocation0]]
  $region53: #{tpu_custom_call.1} parent=0
    _
  %s8 = ssub.s32 1, %s6
  %s9 = scalar_select 0, %s8, %s6
  $region1: #{tpu_custom_call.1} parent=0
    #allocation2 [shape = 'u8[4096]{0}', space=vmem, size = 0x1000, scoped, tag = 'output window, operand 0']
    #allocation3 [shape = 's32[2]{0}', space=sflag, size = 0x8, scoped, tag = 'scoped memory for tpu_custom_call.1']
    %10 = vsyncpa [#allocation3], 0
    %s11 = scalar_lea.sflag [#allocation3], 1
    %12 = vsyncpa %s11, 0
    loop: start=0, step=1, limit=4
    $region2: #{tpu_custom_call.1} parent=1 // loop_pre_header
      _
    $region3: #{tpu_custom_call.1} parent=1 // loop_header
      %s14 = sphi 0, %s18
      %p15 = scmp.ge.s32.totalorder %s14, 4
      %s21 = sphi 0, %s33
      %s22 = sphi 0, %s29
      %s23 = sphi 0, %s21
      %s24 = sphi 0, %s22
      %s25 = sphi 0, %s23
      %s26 = sphi 0, %s24
      %s38 = sphi 0, %s40
      %s41 = sphi 0, %s38
      %s42 = sphi 0, %s41
      %s58 = sphi 0, %s42
      %s62 = sphi 0, %s62
      %s64 = sphi 0, %s62
      %s65 = sphi 0, %s64
      %s79 = sphi 0, %s65
      %s83 = sphi 0, %s83
      %s85 = sphi 0, %s83
      %s86 = sphi 0, %s85
      %s100 = sphi 0, %s86
      %s104 = sphi 0, %s104
      %s106 = sphi 0, %s104
      %s107 = sphi 0, %s106
      %s121 = sphi 0, %s107
      %s125 = sphi 0, %s125
      %s127 = sphi 0, %s125
      %s128 = sphi 0, %s127
      %s142 = sphi 0, %s128
      %s150 = sphi 0, %s152
      %s153 = sphi 0, %s150
      %s154 = sphi 0, %s153
      %s170 = sphi 0, %s154
    $region4: #{tpu_custom_call.1} parent=1 // loop_header_branch
      %17 = sbr.rel (%p15) target = $region8
    $region5: #{tpu_custom_call.1} parent=1 // loop_body
      %s19 = ssub.s32 %s14, 1
      %s20 = ssub.s32 %s14, 2
      %s27 = sadd.s32 1, %s22
      %p28 = scmp.ge.s32.totalorder %s27, 1
      %s29 = scalar_select %p28, 0, %s27
      %s30 = sadd.s32 1, %s21
      %s31 = scalar_select %p28, %s30, %s21
      %p32 = scmp.ge.s32.totalorder %s31, 2
      %s33 = scalar_select %p32, 0, %s31
      %s34 = ssub.s32 %s21, %s33
      %s35 = ssub.s32 %s22, %s29
      %s36 = sor.u32 %s34, %s35
      %p37 = scmp.eq.s32.totalorder %s36, 0
      %s39 = sadd.s32 %s38, 1
      %s40 = scalar_select %p37, %s38, %s39
      %p43 = pneg %p37
      %p44 = scmp.eq.s32.totalorder %s14, 1
      %p45 = por %p43, %p44
      %p46 = scmp.ne.s32.totalorder %s38, %s41
      %p47 = scmp.eq.s32.totalorder %s14, 0
      %p48 = por %p46, %p47
      %p49 = scmp.ne.s32.totalorder %s38, %s41
      %p50 = scmp.eq.s32.totalorder %s19, 1
      %p51 = por %p49, %p50
      %p52 = scmp.ne.s32.totalorder %s41, %s42
      %p53 = scmp.eq.s32.totalorder %s19, 0
      %p54 = por %p52, %p53
      %p55 = scmp.ne.s32.totalorder %s41, %s42
      %p56 = scmp.eq.s32.totalorder %s20, 1
      %p57 = por %p55, %p56
      %p59 = scmp.ne.s32.totalorder %s42, %s58
      %p60 = scmp.eq.s32.totalorder %s20, 0
      %p61 = por %p59, %p60
      %s63 = sadd.s32 %s62, 1
      %p66 = scmp.eq.s32.totalorder %s14, 1
      %p67 = scmp.ne.s32.totalorder %s62, %s64
      %p68 = scmp.eq.s32.totalorder %s14, 0
      %p69 = por %p67, %p68
      %p70 = scmp.ne.s32.totalorder %s62, %s64
      %p71 = scmp.eq.s32.totalorder %s19, 1
      %p72 = por %p70, %p71
      %p73 = scmp.ne.s32.totalorder %s64, %s65
      %p74 = scmp.eq.s32.totalorder %s19, 0
      %p75 = por %p73, %p74
      %p76 = scmp.ne.s32.totalorder %s64, %s65
      %p77 = scmp.eq.s32.totalorder %s20, 1
      %p78 = por %p76, %p77
      %p80 = scmp.ne.s32.totalorder %s65, %s79
      %p81 = scmp.eq.s32.totalorder %s20, 0
      %p82 = por %p80, %p81
      %s84 = sadd.s32 %s83, 1
      %p87 = scmp.eq.s32.totalorder %s14, 1
      %p88 = scmp.ne.s32.totalorder %s83, %s85
      %p89 = scmp.eq.s32.totalorder %s14, 0
      %p90 = por %p88, %p89
      %p91 = scmp.ne.s32.totalorder %s83, %s85
      %p92 = scmp.eq.s32.totalorder %s19, 1
      %p93 = por %p91, %p92
      %p94 = scmp.ne.s32.totalorder %s85, %s86
      %p95 = scmp.eq.s32.totalorder %s19, 0
      %p96 = por %p94, %p95
      %p97 = scmp.ne.s32.totalorder %s85, %s86
      %p98 = scmp.eq.s32.totalorder %s20, 1
      %p99 = por %p97, %p98
      %p101 = scmp.ne.s32.totalorder %s86, %s100
      %p102 = scmp.eq.s32.totalorder %s20, 0
      %p103 = por %p101, %p102
      %s105 = sadd.s32 %s104, 1
      %p108 = scmp.eq.s32.totalorder %s14, 1
      %p109 = scmp.ne.s32.totalorder %s104, %s106
      %p110 = scmp.eq.s32.totalorder %s14, 0
      %p111 = por %p109, %p110
      %p112 = scmp.ne.s32.totalorder %s104, %s106
      %p113 = scmp.eq.s32.totalorder %s19, 1
      %p114 = por %p112, %p113
      %p115 = scmp.ne.s32.totalorder %s106, %s107
      %p116 = scmp.eq.s32.totalorder %s19, 0
      %p117 = por %p115, %p116
      %p118 = scmp.ne.s32.totalorder %s106, %s107
      %p119 = scmp.eq.s32.totalorder %s20, 1
      %p120 = por %p118, %p119
      %p122 = scmp.ne.s32.totalorder %s107, %s121
      %p123 = scmp.eq.s32.totalorder %s20, 0
      %p124 = por %p122, %p123
      %s126 = sadd.s32 %s125, 1
      %p129 = scmp.eq.s32.totalorder %s14, 1
      %p130 = scmp.ne.s32.totalorder %s125, %s127
      %p131 = scmp.eq.s32.totalorder %s14, 0
      %p132 = por %p130, %p131
      %p133 = scmp.ne.s32.totalorder %s125, %s127
      %p134 = scmp.eq.s32.totalorder %s19, 1
      %p135 = por %p133, %p134
      %p136 = scmp.ne.s32.totalorder %s127, %s128
      %p137 = scmp.eq.s32.totalorder %s19, 0
      %p138 = por %p136, %p137
      %p139 = scmp.ne.s32.totalorder %s127, %s128
      %p140 = scmp.eq.s32.totalorder %s20, 1
      %p141 = por %p139, %p140
      %p143 = scmp.ne.s32.totalorder %s128, %s142
      %p144 = scmp.eq.s32.totalorder %s20, 0
      %p145 = por %p143, %p144
      %s146 = ssub.s32 %s21, %s33
      %s147 = ssub.s32 %s22, %s29
      %s148 = sor.u32 %s146, %s147
      %p149 = scmp.eq.s32.totalorder %s148, 0
      %s151 = sadd.s32 %s150, 1
      %s152 = scalar_select %p149, %s150, %s151
      %p155 = pneg %p149
      %p156 = scmp.eq.s32.totalorder %s14, 1
      %p157 = por %p155, %p156
      %p158 = scmp.ne.s32.totalorder %s150, %s153
      %p159 = scmp.eq.s32.totalorder %s14, 0
      %p160 = por %p158, %p159
      %p161 = scmp.ne.s32.totalorder %s150, %s153
      %p162 = scmp.eq.s32.totalorder %s19, 1
      %p163 = por %p161, %p162
      %p164 = scmp.ne.s32.totalorder %s153, %s154
      %p165 = scmp.eq.s32.totalorder %s19, 0
      %p166 = por %p164, %p165
      %p167 = scmp.ne.s32.totalorder %s153, %s154
      %p168 = scmp.eq.s32.totalorder %s20, 1
      %p169 = por %p167, %p168
      %p171 = scmp.ne.s32.totalorder %s154, %s170
      %p172 = scmp.eq.s32.totalorder %s20, 0
      %p173 = por %p171, %p172
      %p174 = scmp.le.s32.totalorder 1, %s14
      %p175 = scmp.lt.s32.totalorder %s14, 3
      %p176 = pnand %p174, %p175
      %p177 = pneg %p176
      // Predicated region
      $region9: #{tpu_custom_call.1} parent=5 // pred_check
        _
      $region10: #{tpu_custom_call.1} parent=5 // pred_check_branch
        %179 = sbr.rel (%p176) target = $region12
      $region11: #{tpu_custom_call.1} parent=5 // pred_region
        %s180 = ssub.s32 %s14, 1
        // Predicated region
        $region13: #{tpu_custom_call.1} parent=11 // pred_check
          %p181 = pneg %p75
        $region14: #{tpu_custom_call.1} parent=11 // pred_check_branch
          %183 = sbr.rel (%p181) target = $region16
        $region15: #{tpu_custom_call.1} parent=11 // pred_region
          _
        $region16: #{tpu_custom_call.1} parent=11 // pred_fallthru
          _
        // Predicated region
        $region17: #{tpu_custom_call.1} parent=11 // pred_check
          %p184 = pneg %p96
        $region18: #{tpu_custom_call.1} parent=11 // pred_check_branch
          %186 = sbr.rel (%p184) target = $region20
        $region19: #{tpu_custom_call.1} parent=11 // pred_region
          _
        $region20: #{tpu_custom_call.1} parent=11 // pred_fallthru
          _
        // Predicated region
        $region21: #{tpu_custom_call.1} parent=11 // pred_check
          %p187 = pneg %p117
        $region22: #{tpu_custom_call.1} parent=11 // pred_check_branch
          %189 = sbr.rel (%p187) target = $region24
        $region23: #{tpu_custom_call.1} parent=11 // pred_region
          _
        $region24: #{tpu_custom_call.1} parent=11 // pred_fallthru
          _
        // Predicated region
        $region25: #{tpu_custom_call.1} parent=11 // pred_check
          %p190 = pneg %p138
        $region26: #{tpu_custom_call.1} parent=11 // pred_check_branch
          %192 = sbr.rel (%p190) target = $region28
        $region27: #{tpu_custom_call.1} parent=11 // pred_region
          _
        $region28: #{tpu_custom_call.1} parent=11 // pred_fallthru
          _
      $region12: #{tpu_custom_call.1} parent=5 // pred_fallthru
        _
      %p193 = scmp.lt.s32.totalorder %s14, 2
      // Predicated region
      $region29: #{tpu_custom_call.1} parent=5 // pred_check
        %p194 = pneg %p193
      $region30: #{tpu_custom_call.1} parent=5 // pred_check_branch
        %196 = sbr.rel (%p194) target = $region32
      $region31: #{tpu_custom_call.1} parent=5 // pred_region
        // Predicated region
        $region33: #{tpu_custom_call.1} parent=31 // pred_check
          %p197 = pneg %p48
        $region34: #{tpu_custom_call.1} parent=31 // pred_check_branch
          %199 = sbr.rel (%p197) target = $region36
        $region35: #{tpu_custom_call.1} parent=31 // pred_region
          %s200 = smul.u32 2, %s22
          %p201 = scmp.lt.s32.totalorder %s21, 1
          %s202 = scalar_select %p201, %s21, 1
          %p203 = scmp.lt.s32.totalorder %s200, 1
          %s204 = scalar_select %p203, %s200, 1
          %s205 = smul.addr %s202, 2
          %s206 = sadd.s32 %s204, %s205
          %s207 = smul.addr %s206, 2
          %s208 = scalar_lea.vmem %s0, %s207
          %s209 = smul.u32 2, %s22
        $region36: #{tpu_custom_call.1} parent=31 // pred_fallthru
          _
      $region32: #{tpu_custom_call.1} parent=5 // pred_fallthru
        _
      %p210 = scmp.le.s32.totalorder 1, %s14
      %p211 = scmp.lt.s32.totalorder %s14, 3
      %p212 = pnand %p210, %p211
      %p213 = pneg %p212
      // Predicated region
      $region37: #{tpu_custom_call.1} parent=5 // pred_check
        _
      $region38: #{tpu_custom_call.1} parent=5 // pred_check_branch
        %215 = sbr.rel (%p212) target = $region40
      $region39: #{tpu_custom_call.1} parent=5 // pred_region
        %s216 = ssub.s32 %s14, 1
        %s217 = smul.u32 2, %s24
        %p218 = scmp.lt.s32.totalorder %s23, 1
        %s219 = scalar_select %p218, %s23, 1
        %p220 = scmp.lt.s32.totalorder %s217, 1
        %s221 = scalar_select %p220, %s217, 1
        %s222 = smul.addr %s219, 2
        %s223 = sadd.s32 %s221, %s222
        %s224 = smul.addr %s223, 2
        %s225 = scalar_lea.vmem %s0, %s224
        %p226 = pneg %p54
        %p227 = pneg %p51
        %p228 = pneg %p75
        %p229 = pneg %p72
        %p230 = pneg %p96
        %p231 = pneg %p93
        %p232 = pneg %p117
        %p233 = pneg %p114
        %p234 = pneg %p138
        %p235 = pneg %p135
        %p236 = pneg %p166
        %p237 = pneg %p163
        %s238 = sand.u32 %s153, 1
        %s239 = scalar_lea.sflag [#allocation3], %s238
        %s240 = sand.u32 %s153, 1
        %s241 = smul.addr %s240, 4
        %s242 = scalar_lea.vmem [#allocation2], %s241
        %s243 = smul.u32 2, %s24
        %p244 = scmp.lt.s32.totalorder %s23, 1
        %s245 = scalar_select %p244, %s23, 1
        %p246 = scmp.lt.s32.totalorder %s243, 1
        %s247 = scalar_select %p246, %s243, 1
        %s248 = smul.addr %s245, 2
        %s249 = sadd.s32 %s247, %s248
        %s250 = smul.addr %s249, 2
        %s251 = scalar_lea.vmem %s0, %s250
        %s252 = smul.u32 2, %s24
        %s253 = smul.u32 2, %s24
        %v255 = vld [vmem:[%s251] sm:$0xf]
        %v256 = vld [vmem:[%s1] sm:$0xf]
        %v257 = vld [vmem:[%s1 + $0x4] sm:$0xf]
        %v258 = vld [vmem:[%s1 + $0x8] sm:$0xf]
        %v259 = vld [vmem:[%s1 + $0xc] sm:$0xf]
        %v260 = vld [vmem:[%s2] sm:$0xff]
        %v261 = vld [vmem:[%s2 + $0x8] sm:$0xff]
        %v262 = vld [vmem:[%s2 + $0x10] sm:$0xff]
        %v263 = vld [vmem:[%s2 + $0x18] sm:$0xff]
        %265 = vset.pattern.permute.xlu0 0
        %266 = vperm.xlu0 %265, %v260
        %v267 = vpop.permute.xlu0 %266
        %270 = vset.pattern.permute.xlu0 0
        %271 = vperm.xlu0 %270, %v261
        %v272 = vpop.permute.xlu0 %271
        %275 = vset.pattern.permute.xlu0 0
        %276 = vperm.xlu0 %275, %v262
        %v277 = vpop.permute.xlu0 %276
        %280 = vset.pattern.permute.xlu0 0
        %281 = vperm.xlu0 %280, %v263
        %v282 = vpop.permute.xlu0 %281
        %v288 = vunpack.c.l.b16 %v256
        %v289 = vunpack.c.l.b16 %v257
        %v290 = vunpack.c.l.b16 %v258
        %v291 = vunpack.c.l.b16 %v259
        %v292 = vpack.c.b16 %v289, %v288
        %v293 = vpack.c.b16 %v291, %v290
        %295 = vst [vmem:[#allocation1] ss:$4 sm:$0xff] %v255
        %v296 = vld.sshfl [vmem:[#allocation1] sm:$0xff pattern:$0x73625140]
        %v297 = vld.sshfl [vmem:[#allocation1 + $0x8] sm:$0xff pattern:$0x73625140]
        %vm298 = vcmask 31744
        %v300 = vsel %vm298, %v292, 0
        %v303 = vsel %vm298, %v293, 0
        %vm305 = vcmask 1041408
        %v306 = vsel %vm305, %v296, 0
        %v308 = vsel %vm305, %v297, 0
        %310 = vmatpush.bf16.msra.mxu0 0
        %311 = vmatpush.bf16.msra.mxu0 0
        %312 = vmatpush.bf16.msra.mxu0 0
        %313 = vmatpush.bf16.msra.mxu0 0
        %314 = vmatpush.bf16.msra.mxu0 0
        %315 = vmatpush.bf16.msra.mxu0 0
        %316 = vmatpush.bf16.msra.mxu0 0
        %317 = vmatpush.bf16.msra.mxu0 %v306
        %318 = vmatmul.bf16.gmra.mxu0 %v300
        %v319 = vpop.f32.mrf.mxu0
        %v320 = vadd.f32 %v267, %v319
        %v321 = vpop.f32.mrf.mxu0
        %v322 = vadd.f32 %v272, %v321
        %323 = vmatmul.bf16.gmra.mxu0 %v303
        %v324 = vpop.f32.mrf.mxu0
        %v325 = vadd.f32 %v277, %v324
        %v326 = vpop.f32.mrf.mxu0
        %v327 = vadd.f32 %v282, %v326
        %328 = vdwg.mxu0
        %329 = vmatpush.bf16.msra.mxu0 0
        %330 = vmatpush.bf16.msra.mxu0 0
        %331 = vmatpush.bf16.msra.mxu0 0
        %332 = vmatpush.bf16.msra.mxu0 0
        %333 = vmatpush.bf16.msra.mxu0 0
        %334 = vmatpush.bf16.msra.mxu0 0
        %335 = vmatpush.bf16.msra.mxu0 0
        %336 = vmatpush.bf16.msra.mxu0 %v308
        %337 = vmatmul.bf16.gmra.mxu0 %v300
        %v338 = vpop.f32.mrf.mxu0
        %v339 = vadd.f32 %v267, %v338
        %v340 = vpop.f32.mrf.mxu0
        %v341 = vadd.f32 %v272, %v340
        %342 = vmatmul.bf16.gmra.mxu0 %v303
        %v343 = vpop.f32.mrf.mxu0
        %v344 = vadd.f32 %v277, %v343
        %v345 = vpop.f32.mrf.mxu0
        %v346 = vadd.f32 %v282, %v345
        %347 = vdwg.mxu0
        %v348 = vmul.f32 %v320, 0.5
        %v349 = vmul.f32 %v339, 0.5
        %v350 = vmul.f32 %v322, 0.5
        %v351 = vmul.f32 %v341, 0.5
        %v352 = vmul.f32 %v325, 0.5
        %v353 = vmul.f32 %v344, 0.5
        %v354 = vmul.f32 %v327, 0.5
        %v355 = vmul.f32 %v346, 0.5
        %v356 = vmul.f32 %v320, 0.70710677
        %v357 = vmul.f32 %v339, 0.70710677
        %v358 = vmul.f32 %v322, 0.70710677
        %v359 = vmul.f32 %v341, 0.70710677
        %v360 = vmul.f32 %v325, 0.70710677
        %v361 = vmul.f32 %v344, 0.70710677
        %v362 = vmul.f32 %v327, 0.70710677
        %v363 = vmul.f32 %v346, 0.70710677
        %v364 = vmul.f32 %v356, %v356
        %v365 = vmin.f32 16.0, %v364
        %v366 = vmul.f32 %v365, 2.1237322e-06
        %v367 = vadd.f32 %v366, 0.00028619796
        %v368 = vmul.f32 %v365, %v367
        %v369 = vadd.f32 %v368, 0.0036580483
        %v370 = vmul.f32 %v365, %v369
        %v371 = vadd.f32 %v370, 0.05243302
        %v372 = vmul.f32 %v365, %v371
        %v373 = vadd.f32 %v372, 0.18741608
        %v374 = vmul.f32 %v365, %v373
        %v375 = vadd.f32 %v374, 1.1283791
        %v376 = vmul.f32 %v356, %v375
        %v377 = vmul.f32 %v365, 3.8918573e-05
        %v378 = vadd.f32 %v377, 0.001143296
        %v379 = vmul.f32 %v365, %v378
        %v380 = vadd.f32 %v379, 0.014752088
        %v381 = vmul.f32 %v365, %v380
        %v382 = vadd.f32 %v381, 0.112945676
        %v383 = vmul.f32 %v365, %v382
        %v384 = vadd.f32 %v383, 0.4994258
        %v385 = vmul.f32 %v365, %v384
        %v386 = vadd.f32 %v385, 1.0
        %v387 = vrcp.pop %v386
        %v388 = vmul.f32 %v386, %v387
        %v389 = vsub.f32 1.0, %v388
        %v390 = vmul.f32 %v387, %v389
        %v391 = vadd.f32 %v387, %v390
        %vm392 = vweird.f32 %v386
        %vm393 = vweird.f32 %v387
        %vm394 = vmor %vm392, %vm393
        %v395 = vsel %vm394, %v387, %v391
        %v396 = vand.u32 2147483647, %v386
        %vm397 = vcmp.eq.f32.partialorder %v396, 8.507059e+37
        %v398 = vand.u32 %v386, 2147483648
        %v399 = vor.u32 1.1754944e-38, %v398
        %v400 = vsel %vm397, %v399, %v395
        %v401 = vmul.f32 %v376, %v400
        %v402 = vmin.f32 %v401, 1.0
        %v403 = vmax.f32 %v402, -1.0
        %v404 = vmul.f32 %v357, %v357
        %v405 = vmin.f32 16.0, %v404
        %v406 = vmul.f32 %v405, 2.1237322e-06
        %v407 = vadd.f32 %v406, 0.00028619796
        %v408 = vmul.f32 %v405, %v407
        %v409 = vadd.f32 %v408, 0.0036580483
        %v410 = vmul.f32 %v405, %v409
        %v411 = vadd.f32 %v410, 0.05243302
        %v412 = vmul.f32 %v405, %v411
        %v413 = vadd.f32 %v412, 0.18741608
        %v414 = vmul.f32 %v405, %v413
        %v415 = vadd.f32 %v414, 1.1283791
        %v416 = vmul.f32 %v357, %v415
        %v417 = vmul.f32 %v405, 3.8918573e-05
        %v418 = vadd.f32 %v417, 0.001143296
        %v419 = vmul.f32 %v405, %v418
        %v420 = vadd.f32 %v419, 0.014752088
        %v421 = vmul.f32 %v405, %v420
        %v422 = vadd.f32 %v421, 0.112945676
        %v423 = vmul.f32 %v405, %v422
        %v424 = vadd.f32 %v423, 0.4994258
        %v425 = vmul.f32 %v405, %v424
        %v426 = vadd.f32 %v425, 1.0
        %v427 = vrcp.pop %v426
        %v428 = vmul.f32 %v426, %v427
        %v429 = vsub.f32 1.0, %v428
        %v430 = vmul.f32 %v427, %v429
        %v431 = vadd.f32 %v427, %v430
        %vm432 = vweird.f32 %v426
        %vm433 = vweird.f32 %v427
        %vm434 = vmor %vm432, %vm433
        %v435 = vsel %vm434, %v427, %v431
        %v436 = vand.u32 2147483647, %v426
        %vm437 = vcmp.eq.f32.partialorder %v436, 8.507059e+37
        %v438 = vand.u32 %v426, 2147483648
        %v439 = vor.u32 1.1754944e-38, %v438
        %v440 = vsel %vm437, %v439, %v435
        %v441 = vmul.f32 %v416, %v440
        %v442 = vmin.f32 %v441, 1.0
        %v443 = vmax.f32 %v442, -1.0
        %v444 = vmul.f32 %v358, %v358
        %v445 = vmin.f32 16.0, %v444
        %v446 = vmul.f32 %v445, 2.1237322e-06
        %v447 = vadd.f32 %v446, 0.00028619796
        %v448 = vmul.f32 %v445, %v447
        %v449 = vadd.f32 %v448, 0.0036580483
        %v450 = vmul.f32 %v445, %v449
        %v451 = vadd.f32 %v450, 0.05243302
        %v452 = vmul.f32 %v445, %v451
        %v453 = vadd.f32 %v452, 0.18741608
        %v454 = vmul.f32 %v445, %v453
        %v455 = vadd.f32 %v454, 1.1283791
        %v456 = vmul.f32 %v358, %v455
        %v457 = vmul.f32 %v445, 3.8918573e-05
        %v458 = vadd.f32 %v457, 0.001143296
        %v459 = vmul.f32 %v445, %v458
        %v460 = vadd.f32 %v459, 0.014752088
        %v461 = vmul.f32 %v445, %v460
        %v462 = vadd.f32 %v461, 0.112945676
        %v463 = vmul.f32 %v445, %v462
        %v464 = vadd.f32 %v463, 0.4994258
        %v465 = vmul.f32 %v445, %v464
        %v466 = vadd.f32 %v465, 1.0
        %v467 = vrcp.pop %v466
        %v468 = vmul.f32 %v466, %v467
        %v469 = vsub.f32 1.0, %v468
        %v470 = vmul.f32 %v467, %v469
        %v471 = vadd.f32 %v467, %v470
        %vm472 = vweird.f32 %v466
        %vm473 = vweird.f32 %v467
        %vm474 = vmor %vm472, %vm473
        %v475 = vsel %vm474, %v467, %v471
        %v476 = vand.u32 2147483647, %v466
        %vm477 = vcmp.eq.f32.partialorder %v476, 8.507059e+37
        %v478 = vand.u32 %v466, 2147483648
        %v479 = vor.u32 1.1754944e-38, %v478
        %v480 = vsel %vm477, %v479, %v475
        %v481 = vmul.f32 %v456, %v480
        %v482 = vmin.f32 %v481, 1.0
        %v483 = vmax.f32 %v482, -1.0
        %v484 = vmul.f32 %v359, %v359
        %v485 = vmin.f32 16.0, %v484
        %v486 = vmul.f32 %v485, 2.1237322e-06
        %v487 = vadd.f32 %v486, 0.00028619796
        %v488 = vmul.f32 %v485, %v487
        %v489 = vadd.f32 %v488, 0.0036580483
        %v490 = vmul.f32 %v485, %v489
        %v491 = vadd.f32 %v490, 0.05243302
        %v492 = vmul.f32 %v485, %v491
        %v493 = vadd.f32 %v492, 0.18741608
        %v494 = vmul.f32 %v485, %v493
        %v495 = vadd.f32 %v494, 1.1283791
        %v496 = vmul.f32 %v359, %v495
        %v497 = vmul.f32 %v485, 3.8918573e-05
        %v498 = vadd.f32 %v497, 0.001143296
        %v499 = vmul.f32 %v485, %v498
        %v500 = vadd.f32 %v499, 0.014752088
        %v501 = vmul.f32 %v485, %v500
        %v502 = vadd.f32 %v501, 0.112945676
        %v503 = vmul.f32 %v485, %v502
        %v504 = vadd.f32 %v503, 0.4994258
        %v505 = vmul.f32 %v485, %v504
        %v506 = vadd.f32 %v505, 1.0
        %v507 = vrcp.pop %v506
        %v508 = vmul.f32 %v506, %v507
        %v509 = vsub.f32 1.0, %v508
        %v510 = vmul.f32 %v507, %v509
        %v511 = vadd.f32 %v507, %v510
        %vm512 = vweird.f32 %v506
        %vm513 = vweird.f32 %v507
        %vm514 = vmor %vm512, %vm513
        %v515 = vsel %vm514, %v507, %v511
        %v516 = vand.u32 2147483647, %v506
        %vm517 = vcmp.eq.f32.partialorder %v516, 8.507059e+37
        %v518 = vand.u32 %v506, 2147483648
        %v519 = vor.u32 1.1754944e-38, %v518
        %v520 = vsel %vm517, %v519, %v515
        %v521 = vmul.f32 %v496, %v520
        %v522 = vmin.f32 %v521, 1.0
        %v523 = vmax.f32 %v522, -1.0
        %v524 = vmul.f32 %v360, %v360
        %v525 = vmin.f32 16.0, %v524
        %v526 = vmul.f32 %v525, 2.1237322e-06
        %v527 = vadd.f32 %v526, 0.00028619796
        %v528 = vmul.f32 %v525, %v527
        %v529 = vadd.f32 %v528, 0.0036580483
        %v530 = vmul.f32 %v525, %v529
        %v531 = vadd.f32 %v530, 0.05243302
        %v532 = vmul.f32 %v525, %v531
        %v533 = vadd.f32 %v532, 0.18741608
        %v534 = vmul.f32 %v525, %v533
        %v535 = vadd.f32 %v534, 1.1283791
        %v536 = vmul.f32 %v360, %v535
        %v537 = vmul.f32 %v525, 3.8918573e-05
        %v538 = vadd.f32 %v537, 0.001143296
        %v539 = vmul.f32 %v525, %v538
        %v540 = vadd.f32 %v539, 0.014752088
        %v541 = vmul.f32 %v525, %v540
        %v542 = vadd.f32 %v541, 0.112945676
        %v543 = vmul.f32 %v525, %v542
        %v544 = vadd.f32 %v543, 0.4994258
        %v545 = vmul.f32 %v525, %v544
        %v546 = vadd.f32 %v545, 1.0
        %v547 = vrcp.pop %v546
        %v548 = vmul.f32 %v546, %v547
        %v549 = vsub.f32 1.0, %v548
        %v550 = vmul.f32 %v547, %v549
        %v551 = vadd.f32 %v547, %v550
        %vm552 = vweird.f32 %v546
        %vm553 = vweird.f32 %v547
        %vm554 = vmor %vm552, %vm553
        %v555 = vsel %vm554, %v547, %v551
        %v556 = vand.u32 2147483647, %v546
        %vm557 = vcmp.eq.f32.partialorder %v556, 8.507059e+37
        %v558 = vand.u32 %v546, 2147483648
        %v559 = vor.u32 1.1754944e-38, %v558
        %v560 = vsel %vm557, %v559, %v555
        %v561 = vmul.f32 %v536, %v560
        %v562 = vmin.f32 %v561, 1.0
        %v563 = vmax.f32 %v562, -1.0
        %v564 = vmul.f32 %v361, %v361
        %v565 = vmin.f32 16.0, %v564
        %v566 = vmul.f32 %v565, 2.1237322e-06
        %v567 = vadd.f32 %v566, 0.00028619796
        %v568 = vmul.f32 %v565, %v567
        %v569 = vadd.f32 %v568, 0.0036580483
        %v570 = vmul.f32 %v565, %v569
        %v571 = vadd.f32 %v570, 0.05243302
        %v572 = vmul.f32 %v565, %v571
        %v573 = vadd.f32 %v572, 0.18741608
        %v574 = vmul.f32 %v565, %v573
        %v575 = vadd.f32 %v574, 1.1283791
        %v576 = vmul.f32 %v361, %v575
        %v577 = vmul.f32 %v565, 3.8918573e-05
        %v578 = vadd.f32 %v577, 0.001143296
        %v579 = vmul.f32 %v565, %v578
        %v580 = vadd.f32 %v579, 0.014752088
        %v581 = vmul.f32 %v565, %v580
        %v582 = vadd.f32 %v581, 0.112945676
        %v583 = vmul.f32 %v565, %v582
        %v584 = vadd.f32 %v583, 0.4994258
        %v585 = vmul.f32 %v565, %v584
        %v586 = vadd.f32 %v585, 1.0
        %v587 = vrcp.pop %v586
        %v588 = vmul.f32 %v586, %v587
        %v589 = vsub.f32 1.0, %v588
        %v590 = vmul.f32 %v587, %v589
        %v591 = vadd.f32 %v587, %v590
        %vm592 = vweird.f32 %v586
        %vm593 = vweird.f32 %v587
        %vm594 = vmor %vm592, %vm593
        %v595 = vsel %vm594, %v587, %v591
        %v596 = vand.u32 2147483647, %v586
        %vm597 = vcmp.eq.f32.partialorder %v596, 8.507059e+37
        %v598 = vand.u32 %v586, 2147483648
        %v599 = vor.u32 1.1754944e-38, %v598
        %v600 = vsel %vm597, %v599, %v595
        %v601 = vmul.f32 %v576, %v600
        %v602 = vmin.f32 %v601, 1.0
        %v603 = vmax.f32 %v602, -1.0
        %v604 = vmul.f32 %v362, %v362
        %v605 = vmin.f32 16.0, %v604
        %v606 = vmul.f32 %v605, 2.1237322e-06
        %v607 = vadd.f32 %v606, 0.00028619796
        %v608 = vmul.f32 %v605, %v607
        %v609 = vadd.f32 %v608, 0.0036580483
        %v610 = vmul.f32 %v605, %v609
        %v611 = vadd.f32 %v610, 0.05243302
        %v612 = vmul.f32 %v605, %v611
        %v613 = vadd.f32 %v612, 0.18741608
        %v614 = vmul.f32 %v605, %v613
        %v615 = vadd.f32 %v614, 1.1283791
        %v616 = vmul.f32 %v362, %v615
        %v617 = vmul.f32 %v605, 3.8918573e-05
        %v618 = vadd.f32 %v617, 0.001143296
        %v619 = vmul.f32 %v605, %v618
        %v620 = vadd.f32 %v619, 0.014752088
        %v621 = vmul.f32 %v605, %v620
        %v622 = vadd.f32 %v621, 0.112945676
        %v623 = vmul.f32 %v605, %v622
        %v624 = vadd.f32 %v623, 0.4994258
        %v625 = vmul.f32 %v605, %v624
        %v626 = vadd.f32 %v625, 1.0
        %v627 = vrcp.pop %v626
        %v628 = vmul.f32 %v626, %v627
        %v629 = vsub.f32 1.0, %v628
        %v630 = vmul.f32 %v627, %v629
        %v631 = vadd.f32 %v627, %v630
        %vm632 = vweird.f32 %v626
        %vm633 = vweird.f32 %v627
        %vm634 = vmor %vm632, %vm633
        %v635 = vsel %vm634, %v627, %v631
        %v636 = vand.u32 2147483647, %v626
        %vm637 = vcmp.eq.f32.partialorder %v636, 8.507059e+37
        %v638 = vand.u32 %v626, 2147483648
        %v639 = vor.u32 1.1754944e-38, %v638
        %v640 = vsel %vm637, %v639, %v635
        %v641 = vmul.f32 %v616, %v640
        %v642 = vmin.f32 %v641, 1.0
        %v643 = vmax.f32 %v642, -1.0
        %v644 = vmul.f32 %v363, %v363
        %v645 = vmin.f32 16.0, %v644
        %v646 = vmul.f32 %v645, 2.1237322e-06
        %v647 = vadd.f32 %v646, 0.00028619796
        %v648 = vmul.f32 %v645, %v647
        %v649 = vadd.f32 %v648, 0.0036580483
        %v650 = vmul.f32 %v645, %v649
        %v651 = vadd.f32 %v650, 0.05243302
        %v652 = vmul.f32 %v645, %v651
        %v653 = vadd.f32 %v652, 0.18741608
        %v654 = vmul.f32 %v645, %v653
        %v655 = vadd.f32 %v654, 1.1283791
        %v656 = vmul.f32 %v363, %v655
        %v657 = vmul.f32 %v645, 3.8918573e-05
        %v658 = vadd.f32 %v657, 0.001143296
        %v659 = vmul.f32 %v645, %v658
        %v660 = vadd.f32 %v659, 0.014752088
        %v661 = vmul.f32 %v645, %v660
        %v662 = vadd.f32 %v661, 0.112945676
        %v663 = vmul.f32 %v645, %v662
        %v664 = vadd.f32 %v663, 0.4994258
        %v665 = vmul.f32 %v645, %v664
        %v666 = vadd.f32 %v665, 1.0
        %v667 = vrcp.pop %v666
        %v668 = vmul.f32 %v666, %v667
        %v669 = vsub.f32 1.0, %v668
        %v670 = vmul.f32 %v667, %v669
        %v671 = vadd.f32 %v667, %v670
        %vm672 = vweird.f32 %v666
        %vm673 = vweird.f32 %v667
        %vm674 = vmor %vm672, %vm673
        %v675 = vsel %vm674, %v667, %v671
        %v676 = vand.u32 2147483647, %v666
        %vm677 = vcmp.eq.f32.partialorder %v676, 8.507059e+37
        %v678 = vand.u32 %v666, 2147483648
        %v679 = vor.u32 1.1754944e-38, %v678
        %v680 = vsel %vm677, %v679, %v675
        %v681 = vmul.f32 %v656, %v680
        %v682 = vmin.f32 %v681, 1.0
        %v683 = vmax.f32 %v682, -1.0
        %v684 = vadd.f32 %v403, 1.0
        %v685 = vadd.f32 %v443, 1.0
        %v686 = vadd.f32 %v483, 1.0
        %v687 = vadd.f32 %v523, 1.0
        %v688 = vadd.f32 %v563, 1.0
        %v689 = vadd.f32 %v603, 1.0
        %v690 = vadd.f32 %v643, 1.0
        %v691 = vadd.f32 %v683, 1.0
        %v692 = vmul.f32 %v348, %v684
        %v693 = vmul.f32 %v349, %v685
        %v694 = vmul.f32 %v350, %v686
        %v695 = vmul.f32 %v351, %v687
        %v696 = vmul.f32 %v352, %v688
        %v697 = vmul.f32 %v353, %v689
        %v698 = vmul.f32 %v354, %v690
        %v699 = vmul.f32 %v355, %v691
        %v700 = vpack.c.bf16 %v694, %v692
        %v701 = vpack.c.bf16 %v695, %v693
        %v702 = vpack.c.bf16 %v698, %v696
        %v703 = vpack.c.bf16 %v699, %v697
        %v704 = vld [vmem:[%s3] sm:$0x3]
        %v705 = vld [vmem:[%s4] sm:$0xf]
        %707 = vset.pattern.permute.xlu0 0
        %708 = vperm.xlu0 %707, %v705
        %v709 = vpop.permute.xlu0 %708
        %vm711 = vcmask 261120
        %v713 = vsel %vm711, %v704, 0
        %715 = vmatpush.bf16.msra.mxu0 0
        %716 = vmatpush.bf16.msra.mxu0 0
        %717 = vmatpush.bf16.msra.mxu0 0
        %718 = vmatpush.bf16.msra.mxu0 0
        %719 = vmatpush.bf16.msra.mxu0 0
        %720 = vmatpush.bf16.msra.mxu0 0
        %721 = vmatpush.bf16.msra.mxu0 %v702
        %722 = vmatpush.bf16.msra.mxu0 %v700
        %723 = vmatmul.bf16.gmra.mxu0 %v713
        %v724 = vpop.f32.mrf.mxu0
        %v725 = vadd.f32 %v709, %v724
        %v726 = vpop.f32.mrf.mxu0
        %727 = vdwg.mxu0
        %728 = vmatpush.bf16.msra.mxu0 0
        %729 = vmatpush.bf16.msra.mxu0 0
        %730 = vmatpush.bf16.msra.mxu0 0
        %731 = vmatpush.bf16.msra.mxu0 0
        %732 = vmatpush.bf16.msra.mxu0 0
        %733 = vmatpush.bf16.msra.mxu0 0
        %734 = vmatpush.bf16.msra.mxu0 %v703
        %735 = vmatpush.bf16.msra.mxu0 %v701
        %736 = vmatmul.bf16.gmra.mxu0 %v713
        %v737 = vpop.f32.mrf.mxu0
        %v738 = vadd.f32 %v709, %v737
        %v739 = vpop.f32.mrf.mxu0
        %740 = vdwg.mxu0
        %v741 = vpack.c.bf16 %v738, %v725
        %v743 = vrot.slane %v741, 2
        %v746 = vsel %vm305, %v741, %v743
        %748 = vst [vmem:[%s242] sm:$0xf] %v746
        %s749 = sand.u32 %s153, 1
        %s750 = scalar_lea.sflag [#allocation3], %s749
        %s751 = sand.u32 %s153, 1
        %s752 = smul.addr %s751, 4
        %s753 = scalar_lea.vmem [#allocation2], %s752
        // Predicated region
        $region41: #{tpu_custom_call.1} parent=39 // pred_check
          %p754 = pneg %p163
        $region42: #{tpu_custom_call.1} parent=39 // pred_check_branch
          %756 = sbr.rel (%p754) target = $region44
        $region43: #{tpu_custom_call.1} parent=39 // pred_region
          %s757 = smul.u32 2, %s24
          %759 = vsyncadd %s750, 0
          %s760 = smul.addr %s23, 2
          %s761 = sadd.s32 %s757, %s760
          %s762 = smul.addr %s761, 2
          %s763 = scalar_lea.hbm %s5, %s762
          %s765 = sshll.u32 %s753, 4
          %s766 = int_to_ptr.vmem [resolvable:$true] %s765
          %s767 = sshll.u32 %s763, 4
          %s768 = int_to_ptr.hbm [resolvable:$true] %s767
          %770 = dma.vmem_to_hbm [thread:$0]  %s766, 64, %s768, %s750
        $region44: #{tpu_custom_call.1} parent=39 // pred_fallthru
          _
      $region40: #{tpu_custom_call.1} parent=5 // pred_fallthru
        _
      %p771 = scmp.le.s32.totalorder 2, %s14
      // Predicated region
      $region45: #{tpu_custom_call.1} parent=5 // pred_check
        %p772 = pneg %p771
      $region46: #{tpu_custom_call.1} parent=5 // pred_check_branch
        %774 = sbr.rel (%p772) target = $region48
      $region47: #{tpu_custom_call.1} parent=5 // pred_region
        %s775 = ssub.s32 %s14, 2
        // Predicated region
        $region49: #{tpu_custom_call.1} parent=47 // pred_check
          %p776 = pneg %p169
        $region50: #{tpu_custom_call.1} parent=47 // pred_check_branch
          %778 = sbr.rel (%p776) target = $region52
        $region51: #{tpu_custom_call.1} parent=47 // pred_region
          %s779 = sand.u32 %s154, 1
          %s780 = scalar_lea.sflag [#allocation3], %s779
          %s781 = sand.u32 %s154, 1
          %s782 = smul.addr %s781, 4
          %s783 = scalar_lea.vmem [#allocation2], %s782
          %785 = dma.done %s780, 64
        $region52: #{tpu_custom_call.1} parent=47 // pred_fallthru
          _
      $region48: #{tpu_custom_call.1} parent=5 // pred_fallthru
        _
    $region6: #{tpu_custom_call.1} parent=1 // loop_footer
      %s18 = sadd.s32 1, %s14
    $region7: #{tpu_custom_call.1} parent=1 // loop_footer_branch
      %13 = sbr.rel target = $region3
    $region8: #{tpu_custom_call.1} parent=1 // loop_exit
      _
    %786 = vsyncpa [#allocation3], 1
    %s787 = scalar_lea.sflag [#allocation3], 1
    %788 = vsyncpa %s787, 1

// kernel: tpu_custom_call.1
$region0: #{tpu_custom_call.1}
  #allocation0 [shape = 'u32[]', space=smem, size = 0x4, offset = 0x4, fixed_abs, tag = 'smem constant byte address 0x4 - core index']
  #allocation1 [shape = 'u32[72,128]{1,0:T(1,128)}', space=vmem, size = 0x9000, scoped, tag = 'internal scratch']
  %s0 = inlined_call_operand.vmem [shape: bf16[2,4,256], index: 0, kind: input, shape index: {}]
  %s1 = inlined_call_operand.vmem [shape: bf16[32,4], index: 1, kind: input, shape index: {}]
  %s2 = inlined_call_operand.vmem [shape: f32[32,1], index: 2, kind: input, shape index: {}]
  %s3 = inlined_call_operand.vmem [shape: bf16[4,32], index: 3, kind: input, shape index: {}]
  %s4 = inlined_call_operand.vmem [shape: f32[4,1], index: 4, kind: input, shape index: {}]
  %s5 = inlined_call_operand.hbm [shape: bf16[2,4,256], index: 5, kind: output, shape index: {}]
  %s6 = sld [smem:[#allocation0]]
  $region53: #{tpu_custom_call.1} parent=0
    _
  %s8 = ssub.s32 1, %s6
  %s9 = scalar_select 0, %s8, %s6
  $region1: #{tpu_custom_call.1} parent=0
    #allocation2 [shape = 'u8[4096]{0}', space=vmem, size = 0x1000, scoped, tag = 'output window, operand 0']
    #allocation3 [shape = 's32[2]{0}', space=sflag, size = 0x8, scoped, tag = 'scoped memory for tpu_custom_call.1']
    %10 = vsyncpa [#allocation3], 0
    %s11 = scalar_lea.sflag [#allocation3], 1
    %12 = vsyncpa %s11, 0
    loop: start=0, step=1, limit=4
    $region2: #{tpu_custom_call.1} parent=1 // loop_pre_header
      _
    $region3: #{tpu_custom_call.1} parent=1 // loop_header
      %s14 = sphi 0, %s18
      %p15 = scmp.ge.s32.totalorder %s14, 4
      %s21 = sphi 0, %s33
      %s22 = sphi 0, %s29
      %s23 = sphi 0, %s21
      %s24 = sphi 0, %s22
      %s25 = sphi 0, %s23
      %s26 = sphi 0, %s24
      %s38 = sphi 0, %s40
      %s41 = sphi 0, %s38
      %s42 = sphi 0, %s41
      %s58 = sphi 0, %s42
      %s62 = sphi 0, %s62
      %s64 = sphi 0, %s62
      %s65 = sphi 0, %s64
      %s79 = sphi 0, %s65
      %s83 = sphi 0, %s83
      %s85 = sphi 0, %s83
      %s86 = sphi 0, %s85
      %s100 = sphi 0, %s86
      %s104 = sphi 0, %s104
      %s106 = sphi 0, %s104
      %s107 = sphi 0, %s106
      %s121 = sphi 0, %s107
      %s125 = sphi 0, %s125
      %s127 = sphi 0, %s125
      %s128 = sphi 0, %s127
      %s142 = sphi 0, %s128
      %s150 = sphi 0, %s152
      %s153 = sphi 0, %s150
      %s154 = sphi 0, %s153
      %s170 = sphi 0, %s154
    $region4: #{tpu_custom_call.1} parent=1 // loop_header_branch
      %17 = sbr.rel (%p15) target = $region8
    $region5: #{tpu_custom_call.1} parent=1 // loop_body
      %s19 = ssub.s32 %s14, 1
      %s20 = ssub.s32 %s14, 2
      %s27 = sadd.s32 1, %s22
      %p28 = scmp.ge.s32.totalorder %s27, 1
      %s29 = scalar_select %p28, 0, %s27
      %s30 = sadd.s32 1, %s21
      %s31 = scalar_select %p28, %s30, %s21
      %p32 = scmp.ge.s32.totalorder %s31, 2
      %s33 = scalar_select %p32, 0, %s31
      %s34 = ssub.s32 %s21, %s33
      %s35 = ssub.s32 %s22, %s29
      %s36 = sor.u32 %s34, %s35
      %p37 = scmp.eq.s32.totalorder %s36, 0
      %s39 = sadd.s32 %s38, 1
      %s40 = scalar_select %p37, %s38, %s39
      %p43 = pneg %p37
      %p44 = scmp.eq.s32.totalorder %s14, 1
      %p45 = por %p43, %p44
      %p46 = scmp.ne.s32.totalorder %s38, %s41
      %p47 = scmp.eq.s32.totalorder %s14, 0
      %p48 = por %p46, %p47
      %p49 = scmp.ne.s32.totalorder %s38, %s41
      %p50 = scmp.eq.s32.totalorder %s19, 1
      %p51 = por %p49, %p50
      %p52 = scmp.ne.s32.totalorder %s41, %s42
      %p53 = scmp.eq.s32.totalorder %s19, 0
      %p54 = por %p52, %p53
      %p55 = scmp.ne.s32.totalorder %s41, %s42
      %p56 = scmp.eq.s32.totalorder %s20, 1
      %p57 = por %p55, %p56
      %p59 = scmp.ne.s32.totalorder %s42, %s58
      %p60 = scmp.eq.s32.totalorder %s20, 0
      %p61 = por %p59, %p60
      %s63 = sadd.s32 %s62, 1
      %p66 = scmp.eq.s32.totalorder %s14, 1
      %p67 = scmp.ne.s32.totalorder %s62, %s64
      %p68 = scmp.eq.s32.totalorder %s14, 0
      %p69 = por %p67, %p68
      %p70 = scmp.ne.s32.totalorder %s62, %s64
      %p71 = scmp.eq.s32.totalorder %s19, 1
      %p72 = por %p70, %p71
      %p73 = scmp.ne.s32.totalorder %s64, %s65
      %p74 = scmp.eq.s32.totalorder %s19, 0
      %p75 = por %p73, %p74
      %p76 = scmp.ne.s32.totalorder %s64, %s65
      %p77 = scmp.eq.s32.totalorder %s20, 1
      %p78 = por %p76, %p77
      %p80 = scmp.ne.s32.totalorder %s65, %s79
      %p81 = scmp.eq.s32.totalorder %s20, 0
      %p82 = por %p80, %p81
      %s84 = sadd.s32 %s83, 1
      %p87 = scmp.eq.s32.totalorder %s14, 1
      %p88 = scmp.ne.s32.totalorder %s83, %s85
      %p89 = scmp.eq.s32.totalorder %s14, 0
      %p90 = por %p88, %p89
      %p91 = scmp.ne.s32.totalorder %s83, %s85
      %p92 = scmp.eq.s32.totalorder %s19, 1
      %p93 = por %p91, %p92
      %p94 = scmp.ne.s32.totalorder %s85, %s86
      %p95 = scmp.eq.s32.totalorder %s19, 0
      %p96 = por %p94, %p95
      %p97 = scmp.ne.s32.totalorder %s85, %s86
      %p98 = scmp.eq.s32.totalorder %s20, 1
      %p99 = por %p97, %p98
      %p101 = scmp.ne.s32.totalorder %s86, %s100
      %p102 = scmp.eq.s32.totalorder %s20, 0
      %p103 = por %p101, %p102
      %s105 = sadd.s32 %s104, 1
      %p108 = scmp.eq.s32.totalorder %s14, 1
      %p109 = scmp.ne.s32.totalorder %s104, %s106
      %p110 = scmp.eq.s32.totalorder %s14, 0
      %p111 = por %p109, %p110
      %p112 = scmp.ne.s32.totalorder %s104, %s106
      %p113 = scmp.eq.s32.totalorder %s19, 1
      %p114 = por %p112, %p113
      %p115 = scmp.ne.s32.totalorder %s106, %s107
      %p116 = scmp.eq.s32.totalorder %s19, 0
      %p117 = por %p115, %p116
      %p118 = scmp.ne.s32.totalorder %s106, %s107
      %p119 = scmp.eq.s32.totalorder %s20, 1
      %p120 = por %p118, %p119
      %p122 = scmp.ne.s32.totalorder %s107, %s121
      %p123 = scmp.eq.s32.totalorder %s20, 0
      %p124 = por %p122, %p123
      %s126 = sadd.s32 %s125, 1
      %p129 = scmp.eq.s32.totalorder %s14, 1
      %p130 = scmp.ne.s32.totalorder %s125, %s127
      %p131 = scmp.eq.s32.totalorder %s14, 0
      %p132 = por %p130, %p131
      %p133 = scmp.ne.s32.totalorder %s125, %s127
      %p134 = scmp.eq.s32.totalorder %s19, 1
      %p135 = por %p133, %p134
      %p136 = scmp.ne.s32.totalorder %s127, %s128
      %p137 = scmp.eq.s32.totalorder %s19, 0
      %p138 = por %p136, %p137
      %p139 = scmp.ne.s32.totalorder %s127, %s128
      %p140 = scmp.eq.s32.totalorder %s20, 1
      %p141 = por %p139, %p140
      %p143 = scmp.ne.s32.totalorder %s128, %s142
      %p144 = scmp.eq.s32.totalorder %s20, 0
      %p145 = por %p143, %p144
      %s146 = ssub.s32 %s21, %s33
      %s147 = ssub.s32 %s22, %s29
      %s148 = sor.u32 %s146, %s147
      %p149 = scmp.eq.s32.totalorder %s148, 0
      %s151 = sadd.s32 %s150, 1
      %s152 = scalar_select %p149, %s150, %s151
      %p155 = pneg %p149
      %p156 = scmp.eq.s32.totalorder %s14, 1
      %p157 = por %p155, %p156
      %p158 = scmp.ne.s32.totalorder %s150, %s153
      %p159 = scmp.eq.s32.totalorder %s14, 0
      %p160 = por %p158, %p159
      %p161 = scmp.ne.s32.totalorder %s150, %s153
      %p162 = scmp.eq.s32.totalorder %s19, 1
      %p163 = por %p161, %p162
      %p164 = scmp.ne.s32.totalorder %s153, %s154
      %p165 = scmp.eq.s32.totalorder %s19, 0
      %p166 = por %p164, %p165
      %p167 = scmp.ne.s32.totalorder %s153, %s154
      %p168 = scmp.eq.s32.totalorder %s20, 1
      %p169 = por %p167, %p168
      %p171 = scmp.ne.s32.totalorder %s154, %s170
      %p172 = scmp.eq.s32.totalorder %s20, 0
      %p173 = por %p171, %p172
      %p174 = scmp.le.s32.totalorder 1, %s14
      %p175 = scmp.lt.s32.totalorder %s14, 3
      %p176 = pnand %p174, %p175
      %p177 = pneg %p176
      // Predicated region
      $region9: #{tpu_custom_call.1} parent=5 // pred_check
        _
      $region10: #{tpu_custom_call.1} parent=5 // pred_check_branch
        %179 = sbr.rel (%p176) target = $region12
      $region11: #{tpu_custom_call.1} parent=5 // pred_region
        %s180 = ssub.s32 %s14, 1
        // Predicated region
        $region13: #{tpu_custom_call.1} parent=11 // pred_check
          %p181 = pneg %p75
        $region14: #{tpu_custom_call.1} parent=11 // pred_check_branch
          %183 = sbr.rel (%p181) target = $region16
        $region15: #{tpu_custom_call.1} parent=11 // pred_region
          _
        $region16: #{tpu_custom_call.1} parent=11 // pred_fallthru
          _
        // Predicated region
        $region17: #{tpu_custom_call.1} parent=11 // pred_check
          %p184 = pneg %p96
        $region18: #{tpu_custom_call.1} parent=11 // pred_check_branch
          %186 = sbr.rel (%p184) target = $region20
        $region19: #{tpu_custom_call.1} parent=11 // pred_region
          _
        $region20: #{tpu_custom_call.1} parent=11 // pred_fallthru
          _
        // Predicated region
        $region21: #{tpu_custom_call.1} parent=11 // pred_check
          %p187 = pneg %p117
        $region22: #{tpu_custom_call.1} parent=11 // pred_check_branch
          %189 = sbr.rel (%p187) target = $region24
        $region23: #{tpu_custom_call.1} parent=11 // pred_region
          _
        $region24: #{tpu_custom_call.1} parent=11 // pred_fallthru
          _
        // Predicated region
        $region25: #{tpu_custom_call.1} parent=11 // pred_check
          %p190 = pneg %p138
        $region26: #{tpu_custom_call.1} parent=11 // pred_check_branch
          %192 = sbr.rel (%p190) target = $region28
        $region27: #{tpu_custom_call.1} parent=11 // pred_region
          _
        $region28: #{tpu_custom_call.1} parent=11 // pred_fallthru
          _
      $region12: #{tpu_custom_call.1} parent=5 // pred_fallthru
        _
      %p193 = scmp.lt.s32.totalorder %s14, 2
      // Predicated region
      $region29: #{tpu_custom_call.1} parent=5 // pred_check
        %p194 = pneg %p193
      $region30: #{tpu_custom_call.1} parent=5 // pred_check_branch
        %196 = sbr.rel (%p194) target = $region32
      $region31: #{tpu_custom_call.1} parent=5 // pred_region
        // Predicated region
        $region33: #{tpu_custom_call.1} parent=31 // pred_check
          %p197 = pneg %p48
        $region34: #{tpu_custom_call.1} parent=31 // pred_check_branch
          %199 = sbr.rel (%p197) target = $region36
        $region35: #{tpu_custom_call.1} parent=31 // pred_region
          %s200 = smul.u32 2, %s22
          %p201 = scmp.lt.s32.totalorder %s21, 1
          %s202 = scalar_select %p201, %s21, 1
          %p203 = scmp.lt.s32.totalorder %s200, 1
          %s204 = scalar_select %p203, %s200, 1
          %s205 = smul.addr %s202, 2
          %s206 = sadd.s32 %s204, %s205
          %s207 = smul.addr %s206, 2
          %s208 = scalar_lea.vmem %s0, %s207
          %s209 = smul.u32 2, %s22
        $region36: #{tpu_custom_call.1} parent=31 // pred_fallthru
          _
      $region32: #{tpu_custom_call.1} parent=5 // pred_fallthru
        _
      %p210 = scmp.le.s32.totalorder 1, %s14
      %p211 = scmp.lt.s32.totalorder %s14, 3
      %p212 = pnand %p210, %p211
      %p213 = pneg %p212
      // Predicated region
      $region37: #{tpu_custom_call.1} parent=5 // pred_check
        _
      $region38: #{tpu_custom_call.1} parent=5 // pred_check_branch
        %215 = sbr.rel (%p212) target = $region40
      $region39: #{tpu_custom_call.1} parent=5 // pred_region
        %s216 = ssub.s32 %s14, 1
        %s217 = smul.u32 2, %s24
        %p218 = scmp.lt.s32.totalorder %s23, 1
        %s219 = scalar_select %p218, %s23, 1
        %p220 = scmp.lt.s32.totalorder %s217, 1
        %s221 = scalar_select %p220, %s217, 1
        %s222 = smul.addr %s219, 2
        %s223 = sadd.s32 %s221, %s222
        %s224 = smul.addr %s223, 2
        %s225 = scalar_lea.vmem %s0, %s224
        %p226 = pneg %p54
        %p227 = pneg %p51
        %p228 = pneg %p75
        %p229 = pneg %p72
        %p230 = pneg %p96
        %p231 = pneg %p93
        %p232 = pneg %p117
        %p233 = pneg %p114
        %p234 = pneg %p138
        %p235 = pneg %p135
        %p236 = pneg %p166
        %p237 = pneg %p163
        %s238 = sand.u32 %s153, 1
        %s239 = scalar_lea.sflag [#allocation3], %s238
        %s240 = sand.u32 %s153, 1
        %s241 = smul.addr %s240, 4
        %s242 = scalar_lea.vmem [#allocation2], %s241
        %s243 = smul.u32 2, %s24
        %p244 = scmp.lt.s32.totalorder %s23, 1
        %s245 = scalar_select %p244, %s23, 1
        %p246 = scmp.lt.s32.totalorder %s243, 1
        %s247 = scalar_select %p246, %s243, 1
        %s248 = smul.addr %s245, 2
        %s249 = sadd.s32 %s247, %s248
        %s250 = smul.addr %s249, 2
        %s251 = scalar_lea.vmem %s0, %s250
        %s252 = smul.u32 2, %s24
        %s253 = smul.u32 2, %s24
        %v255 = vld [vmem:[%s251] sm:$0xf]
        %v256 = vld [vmem:[%s1] sm:$0xf]
        %v257 = vld [vmem:[%s1 + $0x4] sm:$0xf]
        %v258 = vld [vmem:[%s1 + $0x8] sm:$0xf]
        %v259 = vld [vmem:[%s1 + $0xc] sm:$0xf]
        %v260 = vld [vmem:[%s2] sm:$0xff]
        %v261 = vld [vmem:[%s2 + $0x8] sm:$0xff]
        %v262 = vld [vmem:[%s2 + $0x10] sm:$0xff]
        %v263 = vld [vmem:[%s2 + $0x18] sm:$0xff]
        %265 = vset.pattern.permute.xlu0 0
        %266 = vperm.xlu0 %265, %v260
        %v267 = vpop.permute.xlu0 %266
        %270 = vset.pattern.permute.xlu0 0
        %271 = vperm.xlu0 %270, %v261
        %v272 = vpop.permute.xlu0 %271
        %275 = vset.pattern.permute.xlu0 0
        %276 = vperm.xlu0 %275, %v262
        %v277 = vpop.permute.xlu0 %276
        %280 = vset.pattern.permute.xlu0 0
        %281 = vperm.xlu0 %280, %v263
        %v282 = vpop.permute.xlu0 %281
        %v288 = vunpack.c.l.b16 %v256
        %v289 = vunpack.c.l.b16 %v257
        %v290 = vunpack.c.l.b16 %v258
        %v291 = vunpack.c.l.b16 %v259
        %v292 = vpack.c.b16 %v289, %v288
        %v293 = vpack.c.b16 %v291, %v290
        %295 = vst [vmem:[#allocation1] ss:$4 sm:$0xff] %v255
        %v296 = vld.sshfl [vmem:[#allocation1] sm:$0xff pattern:$0x73625140]
        %v297 = vld.sshfl [vmem:[#allocation1 + $0x8] sm:$0xff pattern:$0x73625140]
        %vm298 = vcmask 31744
        %v300 = vsel %vm298, %v292, 0
        %v303 = vsel %vm298, %v293, 0
        %vm305 = vcmask 1041408
        %v306 = vsel %vm305, %v296, 0
        %v308 = vsel %vm305, %v297, 0
        %310 = vmatpush.bf16.msra.mxu0 0
        %311 = vmatpush.bf16.msra.mxu0 0
        %312 = vmatpush.bf16.msra.mxu0 0
        %313 = vmatpush.bf16.msra.mxu0 0
        %314 = vmatpush.bf16.msra.mxu0 0
        %315 = vmatpush.bf16.msra.mxu0 0
        %316 = vmatpush.bf16.msra.mxu0 0
        %317 = vmatpush.bf16.msra.mxu0 %v306
        %318 = vmatmul.bf16.gmra.mxu0 %v300
        %v319 = vpop.f32.mrf.mxu0
        %v320 = vadd.f32 %v267, %v319
        %v321 = vpop.f32.mrf.mxu0
        %v322 = vadd.f32 %v272, %v321
        %323 = vmatmul.bf16.gmra.mxu0 %v303
        %v324 = vpop.f32.mrf.mxu0
        %v325 = vadd.f32 %v277, %v324
        %v326 = vpop.f32.mrf.mxu0
        %v327 = vadd.f32 %v282, %v326
        %328 = vdwg.mxu0
        %329 = vmatpush.bf16.msra.mxu0 0
        %330 = vmatpush.bf16.msra.mxu0 0
        %331 = vmatpush.bf16.msra.mxu0 0
        %332 = vmatpush.bf16.msra.mxu0 0
        %333 = vmatpush.bf16.msra.mxu0 0
        %334 = vmatpush.bf16.msra.mxu0 0
        %335 = vmatpush.bf16.msra.mxu0 0
        %336 = vmatpush.bf16.msra.mxu0 %v308
        %337 = vmatmul.bf16.gmra.mxu0 %v300
        %v338 = vpop.f32.mrf.mxu0
        %v339 = vadd.f32 %v267, %v338
        %v340 = vpop.f32.mrf.mxu0
        %v341 = vadd.f32 %v272, %v340
        %342 = vmatmul.bf16.gmra.mxu0 %v303
        %v343 = vpop.f32.mrf.mxu0
        %v344 = vadd.f32 %v277, %v343
        %v345 = vpop.f32.mrf.mxu0
        %v346 = vadd.f32 %v282, %v345
        %347 = vdwg.mxu0
        %v348 = vmul.f32 %v320, 0.5
        %v349 = vmul.f32 %v339, 0.5
        %v350 = vmul.f32 %v322, 0.5
        %v351 = vmul.f32 %v341, 0.5
        %v352 = vmul.f32 %v325, 0.5
        %v353 = vmul.f32 %v344, 0.5
        %v354 = vmul.f32 %v327, 0.5
        %v355 = vmul.f32 %v346, 0.5
        %v356 = vmul.f32 %v320, 0.70710677
        %v357 = vmul.f32 %v339, 0.70710677
        %v358 = vmul.f32 %v322, 0.70710677
        %v359 = vmul.f32 %v341, 0.70710677
        %v360 = vmul.f32 %v325, 0.70710677
        %v361 = vmul.f32 %v344, 0.70710677
        %v362 = vmul.f32 %v327, 0.70710677
        %v363 = vmul.f32 %v346, 0.70710677
        %v364 = vmul.f32 %v356, %v356
        %v365 = vmin.f32 16.0, %v364
        %v366 = vmul.f32 %v365, 2.1237322e-06
        %v367 = vadd.f32 %v366, 0.00028619796
        %v368 = vmul.f32 %v365, %v367
        %v369 = vadd.f32 %v368, 0.0036580483
        %v370 = vmul.f32 %v365, %v369
        %v371 = vadd.f32 %v370, 0.05243302
        %v372 = vmul.f32 %v365, %v371
        %v373 = vadd.f32 %v372, 0.18741608
        %v374 = vmul.f32 %v365, %v373
        %v375 = vadd.f32 %v374, 1.1283791
        %v376 = vmul.f32 %v356, %v375
        %v377 = vmul.f32 %v365, 3.8918573e-05
        %v378 = vadd.f32 %v377, 0.001143296
        %v379 = vmul.f32 %v365, %v378
        %v380 = vadd.f32 %v379, 0.014752088
        %v381 = vmul.f32 %v365, %v380
        %v382 = vadd.f32 %v381, 0.112945676
        %v383 = vmul.f32 %v365, %v382
        %v384 = vadd.f32 %v383, 0.4994258
        %v385 = vmul.f32 %v365, %v384
        %v386 = vadd.f32 %v385, 1.0
        %v387 = vrcp.pop %v386
        %v388 = vmul.f32 %v386, %v387
        %v389 = vsub.f32 1.0, %v388
        %v390 = vmul.f32 %v387, %v389
        %v391 = vadd.f32 %v387, %v390
        %vm392 = vweird.f32 %v386
        %vm393 = vweird.f32 %v387
        %vm394 = vmor %vm392, %vm393
        %v395 = vsel %vm394, %v387, %v391
        %v396 = vand.u32 2147483647, %v386
        %vm397 = vcmp.eq.f32.partialorder %v396, 8.507059e+37
        %v398 = vand.u32 %v386, 2147483648
        %v399 = vor.u32 1.1754944e-38, %v398
        %v400 = vsel %vm397, %v399, %v395
        %v401 = vmul.f32 %v376, %v400
        %v402 = vmin.f32 %v401, 1.0
        %v403 = vmax.f32 %v402, -1.0
        %v404 = vmul.f32 %v357, %v357
        %v405 = vmin.f32 16.0, %v404
        %v406 = vmul.f32 %v405, 2.1237322e-06
        %v407 = vadd.f32 %v406, 0.00028619796
        %v408 = vmul.f32 %v405, %v407
        %v409 = vadd.f32 %v408, 0.0036580483
        %v410 = vmul.f32 %v405, %v409
        %v411 = vadd.f32 %v410, 0.05243302
        %v412 = vmul.f32 %v405, %v411
        %v413 = vadd.f32 %v412, 0.18741608
        %v414 = vmul.f32 %v405, %v413
        %v415 = vadd.f32 %v414, 1.1283791
        %v416 = vmul.f32 %v357, %v415
        %v417 = vmul.f32 %v405, 3.8918573e-05
        %v418 = vadd.f32 %v417, 0.001143296
        %v419 = vmul.f32 %v405, %v418
        %v420 = vadd.f32 %v419, 0.014752088
        %v421 = vmul.f32 %v405, %v420
        %v422 = vadd.f32 %v421, 0.112945676
        %v423 = vmul.f32 %v405, %v422
        %v424 = vadd.f32 %v423, 0.4994258
        %v425 = vmul.f32 %v405, %v424
        %v426 = vadd.f32 %v425, 1.0
        %v427 = vrcp.pop %v426
        %v428 = vmul.f32 %v426, %v427
        %v429 = vsub.f32 1.0, %v428
        %v430 = vmul.f32 %v427, %v429
        %v431 = vadd.f32 %v427, %v430
        %vm432 = vweird.f32 %v426
        %vm433 = vweird.f32 %v427
        %vm434 = vmor %vm432, %vm433
        %v435 = vsel %vm434, %v427, %v431
        %v436 = vand.u32 2147483647, %v426
        %vm437 = vcmp.eq.f32.partialorder %v436, 8.507059e+37
        %v438 = vand.u32 %v426, 2147483648
        %v439 = vor.u32 1.1754944e-38, %v438
        %v440 = vsel %vm437, %v439, %v435
        %v441 = vmul.f32 %v416, %v440
        %v442 = vmin.f32 %v441, 1.0
        %v443 = vmax.f32 %v442, -1.0
        %v444 = vmul.f32 %v358, %v358
        %v445 = vmin.f32 16.0, %v444
        %v446 = vmul.f32 %v445, 2.1237322e-06
        %v447 = vadd.f32 %v446, 0.00028619796
        %v448 = vmul.f32 %v445, %v447
        %v449 = vadd.f32 %v448, 0.0036580483
        %v450 = vmul.f32 %v445, %v449
        %v451 = vadd.f32 %v450, 0.05243302
        %v452 = vmul.f32 %v445, %v451
        %v453 = vadd.f32 %v452, 0.18741608
        %v454 = vmul.f32 %v445, %v453
        %v455 = vadd.f32 %v454, 1.1283791
        %v456 = vmul.f32 %v358, %v455
        %v457 = vmul.f32 %v445, 3.8918573e-05
        %v458 = vadd.f32 %v457, 0.001143296
        %v459 = vmul.f32 %v445, %v458
        %v460 = vadd.f32 %v459, 0.014752088
        %v461 = vmul.f32 %v445, %v460
        %v462 = vadd.f32 %v461, 0.112945676
        %v463 = vmul.f32 %v445, %v462
        %v464 = vadd.f32 %v463, 0.4994258
        %v465 = vmul.f32 %v445, %v464
        %v466 = vadd.f32 %v465, 1.0
        %v467 = vrcp.pop %v466
        %v468 = vmul.f32 %v466, %v467
        %v469 = vsub.f32 1.0, %v468
        %v470 = vmul.f32 %v467, %v469
        %v471 = vadd.f32 %v467, %v470
        %vm472 = vweird.f32 %v466
        %vm473 = vweird.f32 %v467
        %vm474 = vmor %vm472, %vm473
        %v475 = vsel %vm474, %v467, %v471
        %v476 = vand.u32 2147483647, %v466
        %vm477 = vcmp.eq.f32.partialorder %v476, 8.507059e+37
        %v478 = vand.u32 %v466, 2147483648
        %v479 = vor.u32 1.1754944e-38, %v478
        %v480 = vsel %vm477, %v479, %v475
        %v481 = vmul.f32 %v456, %v480
        %v482 = vmin.f32 %v481, 1.0
        %v483 = vmax.f32 %v482, -1.0
        %v484 = vmul.f32 %v359, %v359
        %v485 = vmin.f32 16.0, %v484
        %v486 = vmul.f32 %v485, 2.1237322e-06
        %v487 = vadd.f32 %v486, 0.00028619796
        %v488 = vmul.f32 %v485, %v487
        %v489 = vadd.f32 %v488, 0.0036580483
        %v490 = vmul.f32 %v485, %v489
        %v491 = vadd.f32 %v490, 0.05243302
        %v492 = vmul.f32 %v485, %v491
        %v493 = vadd.f32 %v492, 0.18741608
        %v494 = vmul.f32 %v485, %v493
        %v495 = vadd.f32 %v494, 1.1283791
        %v496 = vmul.f32 %v359, %v495
        %v497 = vmul.f32 %v485, 3.8918573e-05
        %v498 = vadd.f32 %v497, 0.001143296
        %v499 = vmul.f32 %v485, %v498
        %v500 = vadd.f32 %v499, 0.014752088
        %v501 = vmul.f32 %v485, %v500
        %v502 = vadd.f32 %v501, 0.112945676
        %v503 = vmul.f32 %v485, %v502
        %v504 = vadd.f32 %v503, 0.4994258
        %v505 = vmul.f32 %v485, %v504
        %v506 = vadd.f32 %v505, 1.0
        %v507 = vrcp.pop %v506
        %v508 = vmul.f32 %v506, %v507
        %v509 = vsub.f32 1.0, %v508
        %v510 = vmul.f32 %v507, %v509
        %v511 = vadd.f32 %v507, %v510
        %vm512 = vweird.f32 %v506
        %vm513 = vweird.f32 %v507
        %vm514 = vmor %vm512, %vm513
        %v515 = vsel %vm514, %v507, %v511
        %v516 = vand.u32 2147483647, %v506
        %vm517 = vcmp.eq.f32.partialorder %v516, 8.507059e+37
        %v518 = vand.u32 %v506, 2147483648
        %v519 = vor.u32 1.1754944e-38, %v518
        %v520 = vsel %vm517, %v519, %v515
        %v521 = vmul.f32 %v496, %v520
        %v522 = vmin.f32 %v521, 1.0
        %v523 = vmax.f32 %v522, -1.0
        %v524 = vmul.f32 %v360, %v360
        %v525 = vmin.f32 16.0, %v524
        %v526 = vmul.f32 %v525, 2.1237322e-06
        %v527 = vadd.f32 %v526, 0.00028619796
        %v528 = vmul.f32 %v525, %v527
        %v529 = vadd.f32 %v528, 0.0036580483
        %v530 = vmul.f32 %v525, %v529
        %v531 = vadd.f32 %v530, 0.05243302
        %v532 = vmul.f32 %v525, %v531
        %v533 = vadd.f32 %v532, 0.18741608
        %v534 = vmul.f32 %v525, %v533
        %v535 = vadd.f32 %v534, 1.1283791
        %v536 = vmul.f32 %v360, %v535
        %v537 = vmul.f32 %v525, 3.8918573e-05
        %v538 = vadd.f32 %v537, 0.001143296
        %v539 = vmul.f32 %v525, %v538
        %v540 = vadd.f32 %v539, 0.014752088
        %v541 = vmul.f32 %v525, %v540
        %v542 = vadd.f32 %v541, 0.112945676
        %v543 = vmul.f32 %v525, %v542
        %v544 = vadd.f32 %v543, 0.4994258
        %v545 = vmul.f32 %v525, %v544
        %v546 = vadd.f32 %v545, 1.0
        %v547 = vrcp.pop %v546
        %v548 = vmul.f32 %v546, %v547
        %v549 = vsub.f32 1.0, %v548
        %v550 = vmul.f32 %v547, %v549
        %v551 = vadd.f32 %v547, %v550
        %vm552 = vweird.f32 %v546
        %vm553 = vweird.f32 %v547
        %vm554 = vmor %vm552, %vm553
        %v555 = vsel %vm554, %v547, %v551
        %v556 = vand.u32 2147483647, %v546
        %vm557 = vcmp.eq.f32.partialorder %v556, 8.507059e+37
        %v558 = vand.u32 %v546, 2147483648
        %v559 = vor.u32 1.1754944e-38, %v558
        %v560 = vsel %vm557, %v559, %v555
        %v561 = vmul.f32 %v536, %v560
        %v562 = vmin.f32 %v561, 1.0
        %v563 = vmax.f32 %v562, -1.0
        %v564 = vmul.f32 %v361, %v361
        %v565 = vmin.f32 16.0, %v564
        %v566 = vmul.f32 %v565, 2.1237322e-06
        %v567 = vadd.f32 %v566, 0.00028619796
        %v568 = vmul.f32 %v565, %v567
        %v569 = vadd.f32 %v568, 0.0036580483
        %v570 = vmul.f32 %v565, %v569
        %v571 = vadd.f32 %v570, 0.05243302
        %v572 = vmul.f32 %v565, %v571
        %v573 = vadd.f32 %v572, 0.18741608
        %v574 = vmul.f32 %v565, %v573
        %v575 = vadd.f32 %v574, 1.1283791
        %v576 = vmul.f32 %v361, %v575
        %v577 = vmul.f32 %v565, 3.8918573e-05
        %v578 = vadd.f32 %v577, 0.001143296
        %v579 = vmul.f32 %v565, %v578
        %v580 = vadd.f32 %v579, 0.014752088
        %v581 = vmul.f32 %v565, %v580
        %v582 = vadd.f32 %v581, 0.112945676
        %v583 = vmul.f32 %v565, %v582
        %v584 = vadd.f32 %v583, 0.4994258
        %v585 = vmul.f32 %v565, %v584
        %v586 = vadd.f32 %v585, 1.0
        %v587 = vrcp.pop %v586
        %v588 = vmul.f32 %v586, %v587
        %v589 = vsub.f32 1.0, %v588
        %v590 = vmul.f32 %v587, %v589
        %v591 = vadd.f32 %v587, %v590
        %vm592 = vweird.f32 %v586
        %vm593 = vweird.f32 %v587
        %vm594 = vmor %vm592, %vm593
        %v595 = vsel %vm594, %v587, %v591
        %v596 = vand.u32 2147483647, %v586
        %vm597 = vcmp.eq.f32.partialorder %v596, 8.507059e+37
        %v598 = vand.u32 %v586, 2147483648
        %v599 = vor.u32 1.1754944e-38, %v598
        %v600 = vsel %vm597, %v599, %v595
        %v601 = vmul.f32 %v576, %v600
        %v602 = vmin.f32 %v601, 1.0
        %v603 = vmax.f32 %v602, -1.0
        %v604 = vmul.f32 %v362, %v362
        %v605 = vmin.f32 16.0, %v604
        %v606 = vmul.f32 %v605, 2.1237322e-06
        %v607 = vadd.f32 %v606, 0.00028619796
        %v608 = vmul.f32 %v605, %v607
        %v609 = vadd.f32 %v608, 0.0036580483
        %v610 = vmul.f32 %v605, %v609
        %v611 = vadd.f32 %v610, 0.05243302
        %v612 = vmul.f32 %v605, %v611
        %v613 = vadd.f32 %v612, 0.18741608
        %v614 = vmul.f32 %v605, %v613
        %v615 = vadd.f32 %v614, 1.1283791
        %v616 = vmul.f32 %v362, %v615
        %v617 = vmul.f32 %v605, 3.8918573e-05
        %v618 = vadd.f32 %v617, 0.001143296
        %v619 = vmul.f32 %v605, %v618
        %v620 = vadd.f32 %v619, 0.014752088
        %v621 = vmul.f32 %v605, %v620
        %v622 = vadd.f32 %v621, 0.112945676
        %v623 = vmul.f32 %v605, %v622
        %v624 = vadd.f32 %v623, 0.4994258
        %v625 = vmul.f32 %v605, %v624
        %v626 = vadd.f32 %v625, 1.0
        %v627 = vrcp.pop %v626
        %v628 = vmul.f32 %v626, %v627
        %v629 = vsub.f32 1.0, %v628
        %v630 = vmul.f32 %v627, %v629
        %v631 = vadd.f32 %v627, %v630
        %vm632 = vweird.f32 %v626
        %vm633 = vweird.f32 %v627
        %vm634 = vmor %vm632, %vm633
        %v635 = vsel %vm634, %v627, %v631
        %v636 = vand.u32 2147483647, %v626
        %vm637 = vcmp.eq.f32.partialorder %v636, 8.507059e+37
        %v638 = vand.u32 %v626, 2147483648
        %v639 = vor.u32 1.1754944e-38, %v638
        %v640 = vsel %vm637, %v639, %v635
        %v641 = vmul.f32 %v616, %v640
        %v642 = vmin.f32 %v641, 1.0
        %v643 = vmax.f32 %v642, -1.0
        %v644 = vmul.f32 %v363, %v363
        %v645 = vmin.f32 16.0, %v644
        %v646 = vmul.f32 %v645, 2.1237322e-06
        %v647 = vadd.f32 %v646, 0.00028619796
        %v648 = vmul.f32 %v645, %v647
        %v649 = vadd.f32 %v648, 0.0036580483
        %v650 = vmul.f32 %v645, %v649
        %v651 = vadd.f32 %v650, 0.05243302
        %v652 = vmul.f32 %v645, %v651
        %v653 = vadd.f32 %v652, 0.18741608
        %v654 = vmul.f32 %v645, %v653
        %v655 = vadd.f32 %v654, 1.1283791
        %v656 = vmul.f32 %v363, %v655
        %v657 = vmul.f32 %v645, 3.8918573e-05
        %v658 = vadd.f32 %v657, 0.001143296
        %v659 = vmul.f32 %v645, %v658
        %v660 = vadd.f32 %v659, 0.014752088
        %v661 = vmul.f32 %v645, %v660
        %v662 = vadd.f32 %v661, 0.112945676
        %v663 = vmul.f32 %v645, %v662
        %v664 = vadd.f32 %v663, 0.4994258
        %v665 = vmul.f32 %v645, %v664
        %v666 = vadd.f32 %v665, 1.0
        %v667 = vrcp.pop %v666
        %v668 = vmul.f32 %v666, %v667
        %v669 = vsub.f32 1.0, %v668
        %v670 = vmul.f32 %v667, %v669
        %v671 = vadd.f32 %v667, %v670
        %vm672 = vweird.f32 %v666
        %vm673 = vweird.f32 %v667
        %vm674 = vmor %vm672, %vm673
        %v675 = vsel %vm674, %v667, %v671
        %v676 = vand.u32 2147483647, %v666
        %vm677 = vcmp.eq.f32.partialorder %v676, 8.507059e+37
        %v678 = vand.u32 %v666, 2147483648
        %v679 = vor.u32 1.1754944e-38, %v678
        %v680 = vsel %vm677, %v679, %v675
        %v681 = vmul.f32 %v656, %v680
        %v682 = vmin.f32 %v681, 1.0
        %v683 = vmax.f32 %v682, -1.0
        %v684 = vadd.f32 %v403, 1.0
        %v685 = vadd.f32 %v443, 1.0
        %v686 = vadd.f32 %v483, 1.0
        %v687 = vadd.f32 %v523, 1.0
        %v688 = vadd.f32 %v563, 1.0
        %v689 = vadd.f32 %v603, 1.0
        %v690 = vadd.f32 %v643, 1.0
        %v691 = vadd.f32 %v683, 1.0
        %v692 = vmul.f32 %v348, %v684
        %v693 = vmul.f32 %v349, %v685
        %v694 = vmul.f32 %v350, %v686
        %v695 = vmul.f32 %v351, %v687
        %v696 = vmul.f32 %v352, %v688
        %v697 = vmul.f32 %v353, %v689
        %v698 = vmul.f32 %v354, %v690
        %v699 = vmul.f32 %v355, %v691
        %v700 = vpack.c.bf16 %v694, %v692
        %v701 = vpack.c.bf16 %v695, %v693
        %v702 = vpack.c.bf16 %v698, %v696
        %v703 = vpack.c.bf16 %v699, %v697
        %v704 = vld [vmem:[%s3] sm:$0x3]
        %v705 = vld [vmem:[%s4] sm:$0xf]
        %707 = vset.pattern.permute.xlu0 0
        %708 = vperm.xlu0 %707, %v705
        %v709 = vpop.permute.xlu0 %708
        %vm711 = vcmask 261120
        %v713 = vsel %vm711, %v704, 0
        %715 = vmatpush.bf16.msra.mxu0 0
        %716 = vmatpush.bf16.msra.mxu0 0
        %717 = vmatpush.bf16.msra.mxu0 0
        %718 = vmatpush.bf16.msra.mxu0 0
        %719 = vmatpush.bf16.msra.mxu0 0
        %720 = vmatpush.bf16.msra.mxu0 0
        %721 = vmatpush.bf16.msra.mxu0 %v702
        %722 = vmatpush.bf16.msra.mxu0 %v700
        %723 = vmatmul.bf16.gmra.mxu0 %v713
        %v724 = vpop.f32.mrf.mxu0
        %v725 = vadd.f32 %v709, %v724
        %v726 = vpop.f32.mrf.mxu0
        %727 = vdwg.mxu0
        %728 = vmatpush.bf16.msra.mxu0 0
        %729 = vmatpush.bf16.msra.mxu0 0
        %730 = vmatpush.bf16.msra.mxu0 0
        %731 = vmatpush.bf16.msra.mxu0 0
        %732 = vmatpush.bf16.msra.mxu0 0
        %733 = vmatpush.bf16.msra.mxu0 0
        %734 = vmatpush.bf16.msra.mxu0 %v703
        %735 = vmatpush.bf16.msra.mxu0 %v701
        %736 = vmatmul.bf16.gmra.mxu0 %v713
        %v737 = vpop.f32.mrf.mxu0
        %v738 = vadd.f32 %v709, %v737
        %v739 = vpop.f32.mrf.mxu0
        %740 = vdwg.mxu0
        %v741 = vpack.c.bf16 %v738, %v725
        %v743 = vrot.slane %v741, 2
        %v746 = vsel %vm305, %v741, %v743
        %748 = vst [vmem:[%s242] sm:$0xf] %v746
        %s749 = sand.u32 %s153, 1
        %s750 = scalar_lea.sflag [#allocation3], %s749
        %s751 = sand.u32 %s153, 1
        %s752 = smul.addr %s751, 4
        %s753 = scalar_lea.vmem [#allocation2], %s752
        // Predicated region
        $region41: #{tpu_custom_call.1} parent=39 // pred_check
          %p754 = pneg %p163
        $region42: #{tpu_custom_call.1} parent=39 // pred_check_branch
          %756 = sbr.rel (%p754) target = $region44
        $region43: #{tpu_custom_call.1} parent=39 // pred_region
          %s757 = smul.u32 2, %s24
          %759 = vsyncadd %s750, 0
          %s760 = smul.addr %s23, 2
          %s761 = sadd.s32 %s757, %s760
          %s762 = smul.addr %s761, 2
          %s763 = scalar_lea.hbm %s5, %s762
          %s765 = sshll.u32 %s753, 4
          %s766 = int_to_ptr.vmem [resolvable:$true] %s765
          %s767 = sshll.u32 %s763, 4
          %s768 = int_to_ptr.hbm [resolvable:$true] %s767
          %770 = dma.vmem_to_hbm [thread:$0]  %s766, 64, %s768, %s750
        $region44: #{tpu_custom_call.1} parent=39 // pred_fallthru
          _
      $region40: #{tpu_custom_call.1} parent=5 // pred_fallthru
        _
      %p771 = scmp.le.s32.totalorder 2, %s14
      // Predicated region
      $region45: #{tpu_custom_call.1} parent=5 // pred_check
        %p772 = pneg %p771
      $region46: #{tpu_custom_call.1} parent=5 // pred_check_branch
        %774 = sbr.rel (%p772) target = $region48
      $region47: #{tpu_custom_call.1} parent=5 // pred_region
        %s775 = ssub.s32 %s14, 2
        // Predicated region
        $region49: #{tpu_custom_call.1} parent=47 // pred_check
          %p776 = pneg %p169
        $region50: #{tpu_custom_call.1} parent=47 // pred_check_branch
          %778 = sbr.rel (%p776) target = $region52
        $region51: #{tpu_custom_call.1} parent=47 // pred_region
          %s779 = sand.u32 %s154, 1
          %s780 = scalar_lea.sflag [#allocation3], %s779
          %s781 = sand.u32 %s154, 1
          %s782 = smul.addr %s781, 4
          %s783 = scalar_lea.vmem [#allocation2], %s782
          %785 = dma.done %s780, 64
        $region52: #{tpu_custom_call.1} parent=47 // pred_fallthru
          _
      $region48: #{tpu_custom_call.1} parent=5 // pred_fallthru
        _
    $region6: #{tpu_custom_call.1} parent=1 // loop_footer
      %s18 = sadd.s32 1, %s14
    $region7: #{tpu_custom_call.1} parent=1 // loop_footer_branch
      %13 = sbr.rel target = $region3
    $region8: #{tpu_custom_call.1} parent=1 // loop_exit
      _
    %786 = vsyncpa [#allocation3], 1
    %s787 = scalar_lea.sflag [#allocation3], 1
    %788 = vsyncpa %s787, 1

</llo_original>
